<compile_context>
chip_gen: v5e
topology: v5e:2x2
jax: 0.10.0
libtpu: 0.0.40
codegen_flags: <defaults>
</compile_context>

<pallas_src>
import jax
import jax.numpy as jnp
from jax.experimental import pallas as pl
from jax.experimental.pallas import tpu as pltpu

# ---- problem sizes (small, consistent with the module) ----------------------
B = 2            # number of graphs in the batch
N = 8            # max nodes per graph (de_batchify padding size)
IN_DIM = 16      # input_dim
OUT_DIM = 32     # output_dim (GGNN hidden size D)
E = 3            # max_edge_types
NUM_STEPS = 8    # num_steps
D = OUT_DIM
BN = B * N       # stacked node count
FOURD = 4 * D    # fused GRU gate lanes: [r,z pre-act | i_n | h_n] = 128

# ---- data slab (BN, 128) column layout --------------------------------------
COL_ADJ = 0                  # cols 0:48   block-diag adjacencies [A_0|A_1|A_2]
COL_H0 = E * BN              # cols 48:80  initial node states (padded to D)
COL_MASK = COL_H0 + D        # cols 80:96  per-graph node-sum mask (rows 0:B)
DATA_COLS = 128

# ---- param slab (P_ROWS, 128) row layout ------------------------------------
ROW_WMSG = 0                 # rows 0:96    W'_e = W_e^T @ W_ih_fused, e-major
ROW_WH = E * D               # rows 96:128  W_hh fused into gate lanes
ROW_BE = ROW_WH + D          # rows 128:176 per-edge bias rows, repeated BN x
ROW_BF = ROW_BE + E * BN     # row  176     fused GRU biases
ROW_CWCB = ROW_BF + 1        # row  177     [classifier w^T | classifier b | 0]
P_ROWS = 184                 # padded to a multiple of 8


def _ggnn_sum_kernel(data_ref, param_ref, out_ref):
    f32 = jnp.float32

    # ---- hoisted loads (once, before the unrolled recurrence) ---------------
    adj = [data_ref[:, COL_ADJ + e * BN: COL_ADJ + (e + 1) * BN]
           for e in range(E)]                                      # E x (BN, BN)
    a_cat = data_ref[:, COL_ADJ: COL_ADJ + E * BN]                 # (BN, E*BN)
    h0 = data_ref[:, COL_H0: COL_H0 + D]                           # (BN, D)
    mask_b = data_ref[0:B, COL_MASK: COL_MASK + BN]                # (B, BN)

    w_msg = [param_ref[e * D:(e + 1) * D, :] for e in range(E)]    # E x (D, 4D)
    w_h = param_ref[ROW_WH:ROW_WH + D, :]                          # (D, 4D)
    be_stack = param_ref[ROW_BE:ROW_BE + E * BN, :]                # (E*BN, 4D)
    bf = param_ref[ROW_BF:ROW_BF + 1, :]                           # (1, 4D)
    cw_row = param_ref[ROW_CWCB:ROW_CWCB + 1, 0:D]                 # (1, D)
    cb = param_ref[ROW_CWCB:ROW_CWCB + 1, D:D + 1]                 # (1, 1)

    # ---- loop-invariant bias aggregation: ONE MXU dot ------------------------
    # sum_e A_e @ (1 (x) (be_e @ W_ih_fused)) = A_cat @ BE_stack
    gate_bias = jnp.dot(a_cat, be_stack, preferred_element_type=f32) + bf  # (BN,4D)

    # ---- GGNN recurrence ------------------------------------------------------
    def step(_, h):
        # h @ W_hh is off the critical path; per edge type only 2 chained
        # matmuls remain: (h @ W'_e) -> (A_e @ msg_e), all feeding gate lanes.
        g = gate_bias + jnp.dot(h, w_h, preferred_element_type=f32)       # (BN,4D)
        for e in range(E):                                                 # static
            m = jnp.dot(h, w_msg[e], preferred_element_type=f32)          # (BN,4D)
            g = g + jnp.dot(adj[e], m, preferred_element_type=f32)
        r = jax.nn.sigmoid(g[:, :D])
        z = jax.nn.sigmoid(g[:, D:2 * D])
        n = jnp.tanh(g[:, 2 * D:3 * D] + r * g[:, 3 * D:])
        return (1.0 - z) * n + z * h

    h = jax.lax.fori_loop(0, NUM_STEPS, step, h0, unroll=True)

    # ---- de_batchify padding mask -> per-graph sum -> classifier + sigmoid ----
    gsum = jnp.dot(mask_b, h, preferred_element_type=f32)                  # (B, D)
    logit = jnp.sum(gsum * cw_row, axis=1, keepdims=True) + cb             # (B, 1)
    out_ref[...] = jax.nn.sigmoid(logit)


def pack_params(params):
    """Fuse module parameters into one lane-dense (P_ROWS, 128) slab.
    Call once; the slab is reusable across forward calls."""
    we_t, be, wih_t, whh_t, bih, bhh, cw, cb = params
    # GRU weights mapped onto gate lanes [r,z pre-act | i_n | h_n]
    wfused_a = jnp.concatenate(
        [wih_t, jnp.zeros((D, D), jnp.float32)], axis=1)                   # (D, 4D)
    w_h = jnp.concatenate(
        [whh_t[:, :2 * D], jnp.zeros((D, D), jnp.float32), whh_t[:, 2 * D:]],
        axis=1)                                                            # (D, 4D)
    bfused = jnp.concatenate(
        [bih[:, :2 * D] + bhh[:, :2 * D], bih[:, 2 * D:], bhh[:, 2 * D:]],
        axis=1)                                                            # (1, 4D)
    # fold the GRU "a"-path weights into the per-edge-type message weights
    w_msg = jnp.einsum('eij,jk->eik', we_t, wfused_a).reshape(E * D, FOURD)
    # per-edge-type bias, premultiplied and repeated per node (for A_cat dot)
    be_stack = jnp.repeat(be @ wfused_a, BN, axis=0)                       # (E*BN,4D)
    cwcb = jnp.concatenate(
        [cw.T, cb, jnp.zeros((1, FOURD - D - 1), jnp.float32)], axis=1)    # (1, 4D)
    pad = jnp.zeros((P_ROWS - ROW_CWCB - 1, FOURD), jnp.float32)
    return jnp.concatenate([w_msg, w_h, be_stack, bfused, cwcb, pad], axis=0)


def pack_inputs(features, adjacency, node_mask):
    """Pack per-call data (block-diag adjacency, h0, pooling mask) into one
    lane-dense (BN, 128) slab."""
    feat = features.astype(jnp.float32).reshape(BN, IN_DIM)
    h0 = jnp.pad(feat, ((0, 0), (0, D - IN_DIM)))                          # (BN, D)
    eye_b = jnp.eye(B, dtype=jnp.float32)
    # block-diagonal adjacency per edge type, lane-concatenated by edge type
    a_cat = jnp.einsum('benm,bc->bnecm', adjacency.astype(jnp.float32),
                       eye_b).reshape(BN, E * BN)                          # (BN, 48)
    # per-graph node-sum mask in (B, BN) orientation (block structured)
    mask_b = jnp.einsum('bn,bc->bcn', node_mask.astype(jnp.float32),
                        eye_b).reshape(B, BN)
    mask_blk = jnp.pad(mask_b, ((0, BN - B), (0, 0)))                      # (BN, BN)
    pad = jnp.zeros((BN, DATA_COLS - E * BN - D - BN), jnp.float32)
    return jnp.concatenate([a_cat, h0, mask_blk, pad], axis=1)             # (BN,128)


def ggnn_sum_forward(data_slab, param_slab):
    """Returns (B,) f32 sigmoid probabilities."""
    out = pl.pallas_call(
        _ggnn_sum_kernel,
        out_shape=jax.ShapeDtypeStruct((B, 1), jnp.float32),
        in_specs=[
            pl.BlockSpec(memory_space=pltpu.MemorySpace.VMEM),   # data slab
            pl.BlockSpec(memory_space=pltpu.MemorySpace.VMEM),   # param slab
        ],
        out_specs=pl.BlockSpec(memory_space=pltpu.MemorySpace.VMEM),
    )(data_slab, param_slab)
    return out[:, 0]


def _reference(features, adjacency, node_mask, params):
    """Pure-JAX reference of the same forward pass (unfused formulation)."""
    we_t, be, wih_t, whh_t, bih, bhh, cw, cb = params
    feat_pad = jnp.pad(features, ((0, 0), (0, 0), (0, D - IN_DIM)))
    outs = []
    for b in range(B):
        h = feat_pad[b]
        for _ in range(NUM_STEPS):
            a = jnp.zeros((N, D), jnp.float32)
            for e in range(E):
                a = a + adjacency[b, e] @ (h @ we_t[e] + be[e])
            gi = a @ wih_t + bih[0]
            gh = h @ whh_t + bhh[0]
            r = jax.nn.sigmoid(gi[:, :D] + gh[:, :D])
            z = jax.nn.sigmoid(gi[:, D:2 * D] + gh[:, D:2 * D])
            n = jnp.tanh(gi[:, 2 * D:] + r * gh[:, 2 * D:])
            h = (1.0 - z) * n + z * h
        gsum = jnp.sum(h * node_mask[b][:, None], axis=0)
        outs.append(jax.nn.sigmoid(gsum @ cw[:, 0] + cb[0, 0]))
    return jnp.stack(outs)


def _init_params(key):
    ks = jax.random.split(key, 8)
    scale = 0.1
    we_t = scale * jax.random.normal(ks[0], (E, D, D), jnp.float32)      # W_e^T
    be = scale * jax.random.normal(ks[1], (E, D), jnp.float32)
    wih_t = scale * jax.random.normal(ks[2], (D, 3 * D), jnp.float32)    # GRU W_ih^T
    whh_t = scale * jax.random.normal(ks[3], (D, 3 * D), jnp.float32)    # GRU W_hh^T
    bih = scale * jax.random.normal(ks[4], (1, 3 * D), jnp.float32)
    bhh = scale * jax.random.normal(ks[5], (1, 3 * D), jnp.float32)
    cw = scale * jax.random.normal(ks[6], (D, 1), jnp.float32)           # classifier
    cb = scale * jax.random.normal(ks[7], (1, 1), jnp.float32)
    return we_t, be, wih_t, whh_t, bih, bhh, cw, cb


if __name__ == "__main__":
    key = jax.random.PRNGKey(0)
    k_feat, k_adj, k_par = jax.random.split(key, 3)

    # node counts per graph (de_batchify padding); graph 1 has 6 real nodes
    num_nodes = jnp.array([N, 6], dtype=jnp.int32)
    node_mask = (jnp.arange(N)[None, :] < num_nodes[:, None]).astype(jnp.float32)

    features = jax.random.normal(k_feat, (B, N, IN_DIM), jnp.float32)
    features = features * node_mask[..., None]

    # random sparse-ish adjacency per edge type; no edges touch padded nodes
    adjacency = (jax.random.uniform(k_adj, (B, E, N, N)) < 0.25).astype(jnp.float32)
    adjacency = adjacency * node_mask[:, None, :, None] * node_mask[:, None, None, :]

    params = _init_params(k_par)

    param_slab = pack_params(params)                 # once, reused across calls
    data_slab = pack_inputs(features, adjacency, node_mask)

    result = ggnn_sum_forward(data_slab, param_slab)
    jax.block_until_ready(result)

    ref = _reference(features, adjacency, node_mask, params)
    assert result.shape == (B,)
    assert jnp.allclose(result, ref, atol=1e-4, rtol=1e-4), (result, ref)
    print("KERNEL_OK")
</pallas_src>

<mosaic_0001>
module attributes {stable_mosaic.version = 11 : i64} {
  func.func @_ggnn_sum_kernel(%arg0: memref<16x128xf32, #tpu.memory_space<vmem>>, %arg1: memref<184x128xf32, #tpu.memory_space<vmem>>, %arg2: memref<2x1xf32, #tpu.memory_space<vmem>>) attributes {dimension_semantics = [], scalar_prefetch = 0 : i64, scratch_operands = 0 : i64, tpu.core_type = #tpu.core_type<tc>} {
    %c0 = arith.constant 0 : index
    %c0_0 = arith.constant 0 : index
    %0 = vector.load %arg0[%c0, %c0_0] : memref<16x128xf32, #tpu.memory_space<vmem>>, vector<16x16xf32>
    %c0_1 = arith.constant 0 : index
    %c16 = arith.constant 16 : index
    %1 = vector.load %arg0[%c0_1, %c16] : memref<16x128xf32, #tpu.memory_space<vmem>>, vector<16x16xf32>
    %c0_2 = arith.constant 0 : index
    %c32 = arith.constant 32 : index
    %2 = vector.load %arg0[%c0_2, %c32] : memref<16x128xf32, #tpu.memory_space<vmem>>, vector<16x16xf32>
    %c0_3 = arith.constant 0 : index
    %c0_4 = arith.constant 0 : index
    %3 = vector.load %arg0[%c0_3, %c0_4] : memref<16x128xf32, #tpu.memory_space<vmem>>, vector<16x48xf32>
    %c0_5 = arith.constant 0 : index
    %c48 = arith.constant 48 : index
    %4 = vector.load %arg0[%c0_5, %c48] : memref<16x128xf32, #tpu.memory_space<vmem>>, vector<16x32xf32>
    %c0_6 = arith.constant 0 : index
    %c80 = arith.constant 80 : index
    %5 = vector.load %arg0[%c0_6, %c80] : memref<16x128xf32, #tpu.memory_space<vmem>>, vector<2x16xf32>
    %c0_7 = arith.constant 0 : index
    %c0_8 = arith.constant 0 : index
    %6 = vector.load %arg1[%c0_7, %c0_8] : memref<184x128xf32, #tpu.memory_space<vmem>>, vector<32x128xf32>
    %c32_9 = arith.constant 32 : index
    %c0_10 = arith.constant 0 : index
    %7 = vector.load %arg1[%c32_9, %c0_10] : memref<184x128xf32, #tpu.memory_space<vmem>>, vector<32x128xf32>
    %c64 = arith.constant 64 : index
    %c0_11 = arith.constant 0 : index
    %8 = vector.load %arg1[%c64, %c0_11] : memref<184x128xf32, #tpu.memory_space<vmem>>, vector<32x128xf32>
    %c96 = arith.constant 96 : index
    %c0_12 = arith.constant 0 : index
    %9 = vector.load %arg1[%c96, %c0_12] : memref<184x128xf32, #tpu.memory_space<vmem>>, vector<32x128xf32>
    %c128 = arith.constant 128 : index
    %c0_13 = arith.constant 0 : index
    %10 = vector.load %arg1[%c128, %c0_13] : memref<184x128xf32, #tpu.memory_space<vmem>>, vector<48x128xf32>
    %c176 = arith.constant 176 : index
    %c0_14 = arith.constant 0 : index
    %11 = vector.load %arg1[%c176, %c0_14] : memref<184x128xf32, #tpu.memory_space<vmem>>, vector<1x128xf32>
    %c177 = arith.constant 177 : index
    %c0_15 = arith.constant 0 : index
    %12 = vector.load %arg1[%c177, %c0_15] : memref<184x128xf32, #tpu.memory_space<vmem>>, vector<1x32xf32>
    %c177_16 = arith.constant 177 : index
    %c32_17 = arith.constant 32 : index
    %13 = vector.load %arg1[%c177_16, %c32_17] : memref<184x128xf32, #tpu.memory_space<vmem>>, vector<1x1xf32>
    %cst = arith.constant dense<0.000000e+00> : vector<16x128xf32>
    %14 = tpu.matmul %3, %10, %cst {dimension_numbers = #tpu.dot_dimension_numbers<[1], [0], [0], [1], [0, 0, 1, 1], [], []>} : vector<16x48xf32>, vector<48x128xf32>, vector<16x128xf32> -> vector<16x128xf32>
    %15 = vector.broadcast %11 : vector<1x128xf32> to vector<16x128xf32>
    %16 = arith.addf %14, %15 : vector<16x128xf32>
    %c0_i32 = arith.constant 0 : i32
    %cst_18 = arith.constant dense<0.000000e+00> : vector<16x128xf32>
    %17 = tpu.matmul %4, %9, %cst_18 {dimension_numbers = #tpu.dot_dimension_numbers<[1], [0], [0], [1], [0, 0, 1, 1], [], []>} : vector<16x32xf32>, vector<32x128xf32>, vector<16x128xf32> -> vector<16x128xf32>
    %18 = arith.addf %16, %17 : vector<16x128xf32>
    %cst_19 = arith.constant dense<0.000000e+00> : vector<16x128xf32>
    %19 = tpu.matmul %4, %6, %cst_19 {dimension_numbers = #tpu.dot_dimension_numbers<[1], [0], [0], [1], [0, 0, 1, 1], [], []>} : vector<16x32xf32>, vector<32x128xf32>, vector<16x128xf32> -> vector<16x128xf32>
    %cst_20 = arith.constant dense<0.000000e+00> : vector<16x128xf32>
    %20 = tpu.matmul %0, %19, %cst_20 {dimension_numbers = #tpu.dot_dimension_numbers<[1], [0], [0], [1], [0, 0, 1, 1], [], []>} : vector<16x16xf32>, vector<16x128xf32>, vector<16x128xf32> -> vector<16x128xf32>
    %21 = arith.addf %18, %20 : vector<16x128xf32>
    %cst_21 = arith.constant dense<0.000000e+00> : vector<16x128xf32>
    %22 = tpu.matmul %4, %7, %cst_21 {dimension_numbers = #tpu.dot_dimension_numbers<[1], [0], [0], [1], [0, 0, 1, 1], [], []>} : vector<16x32xf32>, vector<32x128xf32>, vector<16x128xf32> -> vector<16x128xf32>
    %cst_22 = arith.constant dense<0.000000e+00> : vector<16x128xf32>
    %23 = tpu.matmul %1, %22, %cst_22 {dimension_numbers = #tpu.dot_dimension_numbers<[1], [0], [0], [1], [0, 0, 1, 1], [], []>} : vector<16x16xf32>, vector<16x128xf32>, vector<16x128xf32> -> vector<16x128xf32>
    %24 = arith.addf %21, %23 : vector<16x128xf32>
    %cst_23 = arith.constant dense<0.000000e+00> : vector<16x128xf32>
    %25 = tpu.matmul %4, %8, %cst_23 {dimension_numbers = #tpu.dot_dimension_numbers<[1], [0], [0], [1], [0, 0, 1, 1], [], []>} : vector<16x32xf32>, vector<32x128xf32>, vector<16x128xf32> -> vector<16x128xf32>
    %cst_24 = arith.constant dense<0.000000e+00> : vector<16x128xf32>
    %26 = tpu.matmul %2, %25, %cst_24 {dimension_numbers = #tpu.dot_dimension_numbers<[1], [0], [0], [1], [0, 0, 1, 1], [], []>} : vector<16x16xf32>, vector<16x128xf32>, vector<16x128xf32> -> vector<16x128xf32>
    %27 = arith.addf %24, %26 : vector<16x128xf32>
    %28 = vector.extract_strided_slice %27 {offsets = [0, 0], sizes = [16, 32], strides = [1, 1]} : vector<16x128xf32> to vector<16x32xf32>
    %29 = arith.negf %28 : vector<16x32xf32>
    %30 = math.exp %29 : vector<16x32xf32>
    %cst_25 = arith.constant 1.000000e+00 : f32
    %31 = vector.broadcast %cst_25 : f32 to vector<16x32xf32>
    %32 = arith.addf %31, %30 : vector<16x32xf32>
    %33 = arith.divf %31, %32 : vector<16x32xf32>
    %34 = vector.extract_strided_slice %27 {offsets = [0, 32], sizes = [16, 32], strides = [1, 1]} : vector<16x128xf32> to vector<16x32xf32>
    %35 = arith.negf %34 : vector<16x32xf32>
    %36 = math.exp %35 : vector<16x32xf32>
    %cst_26 = arith.constant 1.000000e+00 : f32
    %37 = vector.broadcast %cst_26 : f32 to vector<16x32xf32>
    %38 = arith.addf %37, %36 : vector<16x32xf32>
    %39 = arith.divf %37, %38 : vector<16x32xf32>
    %40 = vector.extract_strided_slice %27 {offsets = [0, 64], sizes = [16, 32], strides = [1, 1]} : vector<16x128xf32> to vector<16x32xf32>
    %41 = vector.extract_strided_slice %27 {offsets = [0, 96], sizes = [16, 32], strides = [1, 1]} : vector<16x128xf32> to vector<16x32xf32>
    %42 = arith.mulf %33, %41 : vector<16x32xf32>
    %43 = arith.addf %40, %42 : vector<16x32xf32>
    %44 = math.tanh %43 : vector<16x32xf32>
    %cst_27 = arith.constant 1.000000e+00 : f32
    %45 = vector.broadcast %cst_27 : f32 to vector<16x32xf32>
    %46 = arith.subf %45, %39 : vector<16x32xf32>
    %47 = arith.mulf %46, %44 : vector<16x32xf32>
    %48 = arith.mulf %39, %4 : vector<16x32xf32>
    %49 = arith.addf %47, %48 : vector<16x32xf32>
    %c1_i32 = arith.constant 1 : i32
    %cst_28 = arith.constant dense<0.000000e+00> : vector<16x128xf32>
    %50 = tpu.matmul %49, %9, %cst_28 {dimension_numbers = #tpu.dot_dimension_numbers<[1], [0], [0], [1], [0, 0, 1, 1], [], []>} : vector<16x32xf32>, vector<32x128xf32>, vector<16x128xf32> -> vector<16x128xf32>
    %51 = arith.addf %16, %50 : vector<16x128xf32>
    %cst_29 = arith.constant dense<0.000000e+00> : vector<16x128xf32>
    %52 = tpu.matmul %49, %6, %cst_29 {dimension_numbers = #tpu.dot_dimension_numbers<[1], [0], [0], [1], [0, 0, 1, 1], [], []>} : vector<16x32xf32>, vector<32x128xf32>, vector<16x128xf32> -> vector<16x128xf32>
    %cst_30 = arith.constant dense<0.000000e+00> : vector<16x128xf32>
    %53 = tpu.matmul %0, %52, %cst_30 {dimension_numbers = #tpu.dot_dimension_numbers<[1], [0], [0], [1], [0, 0, 1, 1], [], []>} : vector<16x16xf32>, vector<16x128xf32>, vector<16x128xf32> -> vector<16x128xf32>
    %54 = arith.addf %51, %53 : vector<16x128xf32>
    %cst_31 = arith.constant dense<0.000000e+00> : vector<16x128xf32>
    %55 = tpu.matmul %49, %7, %cst_31 {dimension_numbers = #tpu.dot_dimension_numbers<[1], [0], [0], [1], [0, 0, 1, 1], [], []>} : vector<16x32xf32>, vector<32x128xf32>, vector<16x128xf32> -> vector<16x128xf32>
    %cst_32 = arith.constant dense<0.000000e+00> : vector<16x128xf32>
    %56 = tpu.matmul %1, %55, %cst_32 {dimension_numbers = #tpu.dot_dimension_numbers<[1], [0], [0], [1], [0, 0, 1, 1], [], []>} : vector<16x16xf32>, vector<16x128xf32>, vector<16x128xf32> -> vector<16x128xf32>
    %57 = arith.addf %54, %56 : vector<16x128xf32>
    %cst_33 = arith.constant dense<0.000000e+00> : vector<16x128xf32>
    %58 = tpu.matmul %49, %8, %cst_33 {dimension_numbers = #tpu.dot_dimension_numbers<[1], [0], [0], [1], [0, 0, 1, 1], [], []>} : vector<16x32xf32>, vector<32x128xf32>, vector<16x128xf32> -> vector<16x128xf32>
    %cst_34 = arith.constant dense<0.000000e+00> : vector<16x128xf32>
    %59 = tpu.matmul %2, %58, %cst_34 {dimension_numbers = #tpu.dot_dimension_numbers<[1], [0], [0], [1], [0, 0, 1, 1], [], []>} : vector<16x16xf32>, vector<16x128xf32>, vector<16x128xf32> -> vector<16x128xf32>
    %60 = arith.addf %57, %59 : vector<16x128xf32>
    %61 = vector.extract_strided_slice %60 {offsets = [0, 0], sizes = [16, 32], strides = [1, 1]} : vector<16x128xf32> to vector<16x32xf32>
    %62 = arith.negf %61 : vector<16x32xf32>
    %63 = math.exp %62 : vector<16x32xf32>
    %cst_35 = arith.constant 1.000000e+00 : f32
    %64 = vector.broadcast %cst_35 : f32 to vector<16x32xf32>
    %65 = arith.addf %64, %63 : vector<16x32xf32>
    %66 = arith.divf %64, %65 : vector<16x32xf32>
    %67 = vector.extract_strided_slice %60 {offsets = [0, 32], sizes = [16, 32], strides = [1, 1]} : vector<16x128xf32> to vector<16x32xf32>
    %68 = arith.negf %67 : vector<16x32xf32>
    %69 = math.exp %68 : vector<16x32xf32>
    %cst_36 = arith.constant 1.000000e+00 : f32
    %70 = vector.broadcast %cst_36 : f32 to vector<16x32xf32>
    %71 = arith.addf %70, %69 : vector<16x32xf32>
    %72 = arith.divf %70, %71 : vector<16x32xf32>
    %73 = vector.extract_strided_slice %60 {offsets = [0, 64], sizes = [16, 32], strides = [1, 1]} : vector<16x128xf32> to vector<16x32xf32>
    %74 = vector.extract_strided_slice %60 {offsets = [0, 96], sizes = [16, 32], strides = [1, 1]} : vector<16x128xf32> to vector<16x32xf32>
    %75 = arith.mulf %66, %74 : vector<16x32xf32>
    %76 = arith.addf %73, %75 : vector<16x32xf32>
    %77 = math.tanh %76 : vector<16x32xf32>
    %cst_37 = arith.constant 1.000000e+00 : f32
    %78 = vector.broadcast %cst_37 : f32 to vector<16x32xf32>
    %79 = arith.subf %78, %72 : vector<16x32xf32>
    %80 = arith.mulf %79, %77 : vector<16x32xf32>
    %81 = arith.mulf %72, %49 : vector<16x32xf32>
    %82 = arith.addf %80, %81 : vector<16x32xf32>
    %c2_i32 = arith.constant 2 : i32
    %cst_38 = arith.constant dense<0.000000e+00> : vector<16x128xf32>
    %83 = tpu.matmul %82, %9, %cst_38 {dimension_numbers = #tpu.dot_dimension_numbers<[1], [0], [0], [1], [0, 0, 1, 1], [], []>} : vector<16x32xf32>, vector<32x128xf32>, vector<16x128xf32> -> vector<16x128xf32>
    %84 = arith.addf %16, %83 : vector<16x128xf32>
    %cst_39 = arith.constant dense<0.000000e+00> : vector<16x128xf32>
    %85 = tpu.matmul %82, %6, %cst_39 {dimension_numbers = #tpu.dot_dimension_numbers<[1], [0], [0], [1], [0, 0, 1, 1], [], []>} : vector<16x32xf32>, vector<32x128xf32>, vector<16x128xf32> -> vector<16x128xf32>
    %cst_40 = arith.constant dense<0.000000e+00> : vector<16x128xf32>
    %86 = tpu.matmul %0, %85, %cst_40 {dimension_numbers = #tpu.dot_dimension_numbers<[1], [0], [0], [1], [0, 0, 1, 1], [], []>} : vector<16x16xf32>, vector<16x128xf32>, vector<16x128xf32> -> vector<16x128xf32>
    %87 = arith.addf %84, %86 : vector<16x128xf32>
    %cst_41 = arith.constant dense<0.000000e+00> : vector<16x128xf32>
    %88 = tpu.matmul %82, %7, %cst_41 {dimension_numbers = #tpu.dot_dimension_numbers<[1], [0], [0], [1], [0, 0, 1, 1], [], []>} : vector<16x32xf32>, vector<32x128xf32>, vector<16x128xf32> -> vector<16x128xf32>
    %cst_42 = arith.constant dense<0.000000e+00> : vector<16x128xf32>
    %89 = tpu.matmul %1, %88, %cst_42 {dimension_numbers = #tpu.dot_dimension_numbers<[1], [0], [0], [1], [0, 0, 1, 1], [], []>} : vector<16x16xf32>, vector<16x128xf32>, vector<16x128xf32> -> vector<16x128xf32>
    %90 = arith.addf %87, %89 : vector<16x128xf32>
    %cst_43 = arith.constant dense<0.000000e+00> : vector<16x128xf32>
    %91 = tpu.matmul %82, %8, %cst_43 {dimension_numbers = #tpu.dot_dimension_numbers<[1], [0], [0], [1], [0, 0, 1, 1], [], []>} : vector<16x32xf32>, vector<32x128xf32>, vector<16x128xf32> -> vector<16x128xf32>
    %cst_44 = arith.constant dense<0.000000e+00> : vector<16x128xf32>
    %92 = tpu.matmul %2, %91, %cst_44 {dimension_numbers = #tpu.dot_dimension_numbers<[1], [0], [0], [1], [0, 0, 1, 1], [], []>} : vector<16x16xf32>, vector<16x128xf32>, vector<16x128xf32> -> vector<16x128xf32>
    %93 = arith.addf %90, %92 : vector<16x128xf32>
    %94 = vector.extract_strided_slice %93 {offsets = [0, 0], sizes = [16, 32], strides = [1, 1]} : vector<16x128xf32> to vector<16x32xf32>
    %95 = arith.negf %94 : vector<16x32xf32>
    %96 = math.exp %95 : vector<16x32xf32>
    %cst_45 = arith.constant 1.000000e+00 : f32
    %97 = vector.broadcast %cst_45 : f32 to vector<16x32xf32>
    %98 = arith.addf %97, %96 : vector<16x32xf32>
    %99 = arith.divf %97, %98 : vector<16x32xf32>
    %100 = vector.extract_strided_slice %93 {offsets = [0, 32], sizes = [16, 32], strides = [1, 1]} : vector<16x128xf32> to vector<16x32xf32>
    %101 = arith.negf %100 : vector<16x32xf32>
    %102 = math.exp %101 : vector<16x32xf32>
    %cst_46 = arith.constant 1.000000e+00 : f32
    %103 = vector.broadcast %cst_46 : f32 to vector<16x32xf32>
    %104 = arith.addf %103, %102 : vector<16x32xf32>
    %105 = arith.divf %103, %104 : vector<16x32xf32>
    %106 = vector.extract_strided_slice %93 {offsets = [0, 64], sizes = [16, 32], strides = [1, 1]} : vector<16x128xf32> to vector<16x32xf32>
    %107 = vector.extract_strided_slice %93 {offsets = [0, 96], sizes = [16, 32], strides = [1, 1]} : vector<16x128xf32> to vector<16x32xf32>
    %108 = arith.mulf %99, %107 : vector<16x32xf32>
    %109 = arith.addf %106, %108 : vector<16x32xf32>
    %110 = math.tanh %109 : vector<16x32xf32>
    %cst_47 = arith.constant 1.000000e+00 : f32
    %111 = vector.broadcast %cst_47 : f32 to vector<16x32xf32>
    %112 = arith.subf %111, %105 : vector<16x32xf32>
    %113 = arith.mulf %112, %110 : vector<16x32xf32>
    %114 = arith.mulf %105, %82 : vector<16x32xf32>
    %115 = arith.addf %113, %114 : vector<16x32xf32>
    %c3_i32 = arith.constant 3 : i32
    %cst_48 = arith.constant dense<0.000000e+00> : vector<16x128xf32>
    %116 = tpu.matmul %115, %9, %cst_48 {dimension_numbers = #tpu.dot_dimension_numbers<[1], [0], [0], [1], [0, 0, 1, 1], [], []>} : vector<16x32xf32>, vector<32x128xf32>, vector<16x128xf32> -> vector<16x128xf32>
    %117 = arith.addf %16, %116 : vector<16x128xf32>
    %cst_49 = arith.constant dense<0.000000e+00> : vector<16x128xf32>
    %118 = tpu.matmul %115, %6, %cst_49 {dimension_numbers = #tpu.dot_dimension_numbers<[1], [0], [0], [1], [0, 0, 1, 1], [], []>} : vector<16x32xf32>, vector<32x128xf32>, vector<16x128xf32> -> vector<16x128xf32>
    %cst_50 = arith.constant dense<0.000000e+00> : vector<16x128xf32>
    %119 = tpu.matmul %0, %118, %cst_50 {dimension_numbers = #tpu.dot_dimension_numbers<[1], [0], [0], [1], [0, 0, 1, 1], [], []>} : vector<16x16xf32>, vector<16x128xf32>, vector<16x128xf32> -> vector<16x128xf32>
    %120 = arith.addf %117, %119 : vector<16x128xf32>
    %cst_51 = arith.constant dense<0.000000e+00> : vector<16x128xf32>
    %121 = tpu.matmul %115, %7, %cst_51 {dimension_numbers = #tpu.dot_dimension_numbers<[1], [0], [0], [1], [0, 0, 1, 1], [], []>} : vector<16x32xf32>, vector<32x128xf32>, vector<16x128xf32> -> vector<16x128xf32>
    %cst_52 = arith.constant dense<0.000000e+00> : vector<16x128xf32>
    %122 = tpu.matmul %1, %121, %cst_52 {dimension_numbers = #tpu.dot_dimension_numbers<[1], [0], [0], [1], [0, 0, 1, 1], [], []>} : vector<16x16xf32>, vector<16x128xf32>, vector<16x128xf32> -> vector<16x128xf32>
    %123 = arith.addf %120, %122 : vector<16x128xf32>
    %cst_53 = arith.constant dense<0.000000e+00> : vector<16x128xf32>
    %124 = tpu.matmul %115, %8, %cst_53 {dimension_numbers = #tpu.dot_dimension_numbers<[1], [0], [0], [1], [0, 0, 1, 1], [], []>} : vector<16x32xf32>, vector<32x128xf32>, vector<16x128xf32> -> vector<16x128xf32>
    %cst_54 = arith.constant dense<0.000000e+00> : vector<16x128xf32>
    %125 = tpu.matmul %2, %124, %cst_54 {dimension_numbers = #tpu.dot_dimension_numbers<[1], [0], [0], [1], [0, 0, 1, 1], [], []>} : vector<16x16xf32>, vector<16x128xf32>, vector<16x128xf32> -> vector<16x128xf32>
    %126 = arith.addf %123, %125 : vector<16x128xf32>
    %127 = vector.extract_strided_slice %126 {offsets = [0, 0], sizes = [16, 32], strides = [1, 1]} : vector<16x128xf32> to vector<16x32xf32>
    %128 = arith.negf %127 : vector<16x32xf32>
    %129 = math.exp %128 : vector<16x32xf32>
    %cst_55 = arith.constant 1.000000e+00 : f32
    %130 = vector.broadcast %cst_55 : f32 to vector<16x32xf32>
    %131 = arith.addf %130, %129 : vector<16x32xf32>
    %132 = arith.divf %130, %131 : vector<16x32xf32>
    %133 = vector.extract_strided_slice %126 {offsets = [0, 32], sizes = [16, 32], strides = [1, 1]} : vector<16x128xf32> to vector<16x32xf32>
    %134 = arith.negf %133 : vector<16x32xf32>
    %135 = math.exp %134 : vector<16x32xf32>
    %cst_56 = arith.constant 1.000000e+00 : f32
    %136 = vector.broadcast %cst_56 : f32 to vector<16x32xf32>
    %137 = arith.addf %136, %135 : vector<16x32xf32>
    %138 = arith.divf %136, %137 : vector<16x32xf32>
    %139 = vector.extract_strided_slice %126 {offsets = [0, 64], sizes = [16, 32], strides = [1, 1]} : vector<16x128xf32> to vector<16x32xf32>
    %140 = vector.extract_strided_slice %126 {offsets = [0, 96], sizes = [16, 32], strides = [1, 1]} : vector<16x128xf32> to vector<16x32xf32>
    %141 = arith.mulf %132, %140 : vector<16x32xf32>
    %142 = arith.addf %139, %141 : vector<16x32xf32>
    %143 = math.tanh %142 : vector<16x32xf32>
    %cst_57 = arith.constant 1.000000e+00 : f32
    %144 = vector.broadcast %cst_57 : f32 to vector<16x32xf32>
    %145 = arith.subf %144, %138 : vector<16x32xf32>
    %146 = arith.mulf %145, %143 : vector<16x32xf32>
    %147 = arith.mulf %138, %115 : vector<16x32xf32>
    %148 = arith.addf %146, %147 : vector<16x32xf32>
    %c4_i32 = arith.constant 4 : i32
    %cst_58 = arith.constant dense<0.000000e+00> : vector<16x128xf32>
    %149 = tpu.matmul %148, %9, %cst_58 {dimension_numbers = #tpu.dot_dimension_numbers<[1], [0], [0], [1], [0, 0, 1, 1], [], []>} : vector<16x32xf32>, vector<32x128xf32>, vector<16x128xf32> -> vector<16x128xf32>
    %150 = arith.addf %16, %149 : vector<16x128xf32>
    %cst_59 = arith.constant dense<0.000000e+00> : vector<16x128xf32>
    %151 = tpu.matmul %148, %6, %cst_59 {dimension_numbers = #tpu.dot_dimension_numbers<[1], [0], [0], [1], [0, 0, 1, 1], [], []>} : vector<16x32xf32>, vector<32x128xf32>, vector<16x128xf32> -> vector<16x128xf32>
    %cst_60 = arith.constant dense<0.000000e+00> : vector<16x128xf32>
    %152 = tpu.matmul %0, %151, %cst_60 {dimension_numbers = #tpu.dot_dimension_numbers<[1], [0], [0], [1], [0, 0, 1, 1], [], []>} : vector<16x16xf32>, vector<16x128xf32>, vector<16x128xf32> -> vector<16x128xf32>
    %153 = arith.addf %150, %152 : vector<16x128xf32>
    %cst_61 = arith.constant dense<0.000000e+00> : vector<16x128xf32>
    %154 = tpu.matmul %148, %7, %cst_61 {dimension_numbers = #tpu.dot_dimension_numbers<[1], [0], [0], [1], [0, 0, 1, 1], [], []>} : vector<16x32xf32>, vector<32x128xf32>, vector<16x128xf32> -> vector<16x128xf32>
    %cst_62 = arith.constant dense<0.000000e+00> : vector<16x128xf32>
    %155 = tpu.matmul %1, %154, %cst_62 {dimension_numbers = #tpu.dot_dimension_numbers<[1], [0], [0], [1], [0, 0, 1, 1], [], []>} : vector<16x16xf32>, vector<16x128xf32>, vector<16x128xf32> -> vector<16x128xf32>
    %156 = arith.addf %153, %155 : vector<16x128xf32>
    %cst_63 = arith.constant dense<0.000000e+00> : vector<16x128xf32>
    %157 = tpu.matmul %148, %8, %cst_63 {dimension_numbers = #tpu.dot_dimension_numbers<[1], [0], [0], [1], [0, 0, 1, 1], [], []>} : vector<16x32xf32>, vector<32x128xf32>, vector<16x128xf32> -> vector<16x128xf32>
    %cst_64 = arith.constant dense<0.000000e+00> : vector<16x128xf32>
    %158 = tpu.matmul %2, %157, %cst_64 {dimension_numbers = #tpu.dot_dimension_numbers<[1], [0], [0], [1], [0, 0, 1, 1], [], []>} : vector<16x16xf32>, vector<16x128xf32>, vector<16x128xf32> -> vector<16x128xf32>
    %159 = arith.addf %156, %158 : vector<16x128xf32>
    %160 = vector.extract_strided_slice %159 {offsets = [0, 0], sizes = [16, 32], strides = [1, 1]} : vector<16x128xf32> to vector<16x32xf32>
    %161 = arith.negf %160 : vector<16x32xf32>
    %162 = math.exp %161 : vector<16x32xf32>
    %cst_65 = arith.constant 1.000000e+00 : f32
    %163 = vector.broadcast %cst_65 : f32 to vector<16x32xf32>
    %164 = arith.addf %163, %162 : vector<16x32xf32>
    %165 = arith.divf %163, %164 : vector<16x32xf32>
    %166 = vector.extract_strided_slice %159 {offsets = [0, 32], sizes = [16, 32], strides = [1, 1]} : vector<16x128xf32> to vector<16x32xf32>
    %167 = arith.negf %166 : vector<16x32xf32>
    %168 = math.exp %167 : vector<16x32xf32>
    %cst_66 = arith.constant 1.000000e+00 : f32
    %169 = vector.broadcast %cst_66 : f32 to vector<16x32xf32>
    %170 = arith.addf %169, %168 : vector<16x32xf32>
    %171 = arith.divf %169, %170 : vector<16x32xf32>
    %172 = vector.extract_strided_slice %159 {offsets = [0, 64], sizes = [16, 32], strides = [1, 1]} : vector<16x128xf32> to vector<16x32xf32>
    %173 = vector.extract_strided_slice %159 {offsets = [0, 96], sizes = [16, 32], strides = [1, 1]} : vector<16x128xf32> to vector<16x32xf32>
    %174 = arith.mulf %165, %173 : vector<16x32xf32>
    %175 = arith.addf %172, %174 : vector<16x32xf32>
    %176 = math.tanh %175 : vector<16x32xf32>
    %cst_67 = arith.constant 1.000000e+00 : f32
    %177 = vector.broadcast %cst_67 : f32 to vector<16x32xf32>
    %178 = arith.subf %177, %171 : vector<16x32xf32>
    %179 = arith.mulf %178, %176 : vector<16x32xf32>
    %180 = arith.mulf %171, %148 : vector<16x32xf32>
    %181 = arith.addf %179, %180 : vector<16x32xf32>
    %c5_i32 = arith.constant 5 : i32
    %cst_68 = arith.constant dense<0.000000e+00> : vector<16x128xf32>
    %182 = tpu.matmul %181, %9, %cst_68 {dimension_numbers = #tpu.dot_dimension_numbers<[1], [0], [0], [1], [0, 0, 1, 1], [], []>} : vector<16x32xf32>, vector<32x128xf32>, vector<16x128xf32> -> vector<16x128xf32>
    %183 = arith.addf %16, %182 : vector<16x128xf32>
    %cst_69 = arith.constant dense<0.000000e+00> : vector<16x128xf32>
    %184 = tpu.matmul %181, %6, %cst_69 {dimension_numbers = #tpu.dot_dimension_numbers<[1], [0], [0], [1], [0, 0, 1, 1], [], []>} : vector<16x32xf32>, vector<32x128xf32>, vector<16x128xf32> -> vector<16x128xf32>
    %cst_70 = arith.constant dense<0.000000e+00> : vector<16x128xf32>
    %185 = tpu.matmul %0, %184, %cst_70 {dimension_numbers = #tpu.dot_dimension_numbers<[1], [0], [0], [1], [0, 0, 1, 1], [], []>} : vector<16x16xf32>, vector<16x128xf32>, vector<16x128xf32> -> vector<16x128xf32>
    %186 = arith.addf %183, %185 : vector<16x128xf32>
    %cst_71 = arith.constant dense<0.000000e+00> : vector<16x128xf32>
    %187 = tpu.matmul %181, %7, %cst_71 {dimension_numbers = #tpu.dot_dimension_numbers<[1], [0], [0], [1], [0, 0, 1, 1], [], []>} : vector<16x32xf32>, vector<32x128xf32>, vector<16x128xf32> -> vector<16x128xf32>
    %cst_72 = arith.constant dense<0.000000e+00> : vector<16x128xf32>
    %188 = tpu.matmul %1, %187, %cst_72 {dimension_numbers = #tpu.dot_dimension_numbers<[1], [0], [0], [1], [0, 0, 1, 1], [], []>} : vector<16x16xf32>, vector<16x128xf32>, vector<16x128xf32> -> vector<16x128xf32>
    %189 = arith.addf %186, %188 : vector<16x128xf32>
    %cst_73 = arith.constant dense<0.000000e+00> : vector<16x128xf32>
    %190 = tpu.matmul %181, %8, %cst_73 {dimension_numbers = #tpu.dot_dimension_numbers<[1], [0], [0], [1], [0, 0, 1, 1], [], []>} : vector<16x32xf32>, vector<32x128xf32>, vector<16x128xf32> -> vector<16x128xf32>
    %cst_74 = arith.constant dense<0.000000e+00> : vector<16x128xf32>
    %191 = tpu.matmul %2, %190, %cst_74 {dimension_numbers = #tpu.dot_dimension_numbers<[1], [0], [0], [1], [0, 0, 1, 1], [], []>} : vector<16x16xf32>, vector<16x128xf32>, vector<16x128xf32> -> vector<16x128xf32>
    %192 = arith.addf %189, %191 : vector<16x128xf32>
    %193 = vector.extract_strided_slice %192 {offsets = [0, 0], sizes = [16, 32], strides = [1, 1]} : vector<16x128xf32> to vector<16x32xf32>
    %194 = arith.negf %193 : vector<16x32xf32>
    %195 = math.exp %194 : vector<16x32xf32>
    %cst_75 = arith.constant 1.000000e+00 : f32
    %196 = vector.broadcast %cst_75 : f32 to vector<16x32xf32>
    %197 = arith.addf %196, %195 : vector<16x32xf32>
    %198 = arith.divf %196, %197 : vector<16x32xf32>
    %199 = vector.extract_strided_slice %192 {offsets = [0, 32], sizes = [16, 32], strides = [1, 1]} : vector<16x128xf32> to vector<16x32xf32>
    %200 = arith.negf %199 : vector<16x32xf32>
    %201 = math.exp %200 : vector<16x32xf32>
    %cst_76 = arith.constant 1.000000e+00 : f32
    %202 = vector.broadcast %cst_76 : f32 to vector<16x32xf32>
    %203 = arith.addf %202, %201 : vector<16x32xf32>
    %204 = arith.divf %202, %203 : vector<16x32xf32>
    %205 = vector.extract_strided_slice %192 {offsets = [0, 64], sizes = [16, 32], strides = [1, 1]} : vector<16x128xf32> to vector<16x32xf32>
    %206 = vector.extract_strided_slice %192 {offsets = [0, 96], sizes = [16, 32], strides = [1, 1]} : vector<16x128xf32> to vector<16x32xf32>
    %207 = arith.mulf %198, %206 : vector<16x32xf32>
    %208 = arith.addf %205, %207 : vector<16x32xf32>
    %209 = math.tanh %208 : vector<16x32xf32>
    %cst_77 = arith.constant 1.000000e+00 : f32
    %210 = vector.broadcast %cst_77 : f32 to vector<16x32xf32>
    %211 = arith.subf %210, %204 : vector<16x32xf32>
    %212 = arith.mulf %211, %209 : vector<16x32xf32>
    %213 = arith.mulf %204, %181 : vector<16x32xf32>
    %214 = arith.addf %212, %213 : vector<16x32xf32>
    %c6_i32 = arith.constant 6 : i32
    %cst_78 = arith.constant dense<0.000000e+00> : vector<16x128xf32>
    %215 = tpu.matmul %214, %9, %cst_78 {dimension_numbers = #tpu.dot_dimension_numbers<[1], [0], [0], [1], [0, 0, 1, 1], [], []>} : vector<16x32xf32>, vector<32x128xf32>, vector<16x128xf32> -> vector<16x128xf32>
    %216 = arith.addf %16, %215 : vector<16x128xf32>
    %cst_79 = arith.constant dense<0.000000e+00> : vector<16x128xf32>
    %217 = tpu.matmul %214, %6, %cst_79 {dimension_numbers = #tpu.dot_dimension_numbers<[1], [0], [0], [1], [0, 0, 1, 1], [], []>} : vector<16x32xf32>, vector<32x128xf32>, vector<16x128xf32> -> vector<16x128xf32>
    %cst_80 = arith.constant dense<0.000000e+00> : vector<16x128xf32>
    %218 = tpu.matmul %0, %217, %cst_80 {dimension_numbers = #tpu.dot_dimension_numbers<[1], [0], [0], [1], [0, 0, 1, 1], [], []>} : vector<16x16xf32>, vector<16x128xf32>, vector<16x128xf32> -> vector<16x128xf32>
    %219 = arith.addf %216, %218 : vector<16x128xf32>
    %cst_81 = arith.constant dense<0.000000e+00> : vector<16x128xf32>
    %220 = tpu.matmul %214, %7, %cst_81 {dimension_numbers = #tpu.dot_dimension_numbers<[1], [0], [0], [1], [0, 0, 1, 1], [], []>} : vector<16x32xf32>, vector<32x128xf32>, vector<16x128xf32> -> vector<16x128xf32>
    %cst_82 = arith.constant dense<0.000000e+00> : vector<16x128xf32>
    %221 = tpu.matmul %1, %220, %cst_82 {dimension_numbers = #tpu.dot_dimension_numbers<[1], [0], [0], [1], [0, 0, 1, 1], [], []>} : vector<16x16xf32>, vector<16x128xf32>, vector<16x128xf32> -> vector<16x128xf32>
    %222 = arith.addf %219, %221 : vector<16x128xf32>
    %cst_83 = arith.constant dense<0.000000e+00> : vector<16x128xf32>
    %223 = tpu.matmul %214, %8, %cst_83 {dimension_numbers = #tpu.dot_dimension_numbers<[1], [0], [0], [1], [0, 0, 1, 1], [], []>} : vector<16x32xf32>, vector<32x128xf32>, vector<16x128xf32> -> vector<16x128xf32>
    %cst_84 = arith.constant dense<0.000000e+00> : vector<16x128xf32>
    %224 = tpu.matmul %2, %223, %cst_84 {dimension_numbers = #tpu.dot_dimension_numbers<[1], [0], [0], [1], [0, 0, 1, 1], [], []>} : vector<16x16xf32>, vector<16x128xf32>, vector<16x128xf32> -> vector<16x128xf32>
    %225 = arith.addf %222, %224 : vector<16x128xf32>
    %226 = vector.extract_strided_slice %225 {offsets = [0, 0], sizes = [16, 32], strides = [1, 1]} : vector<16x128xf32> to vector<16x32xf32>
    %227 = arith.negf %226 : vector<16x32xf32>
    %228 = math.exp %227 : vector<16x32xf32>
    %cst_85 = arith.constant 1.000000e+00 : f32
    %229 = vector.broadcast %cst_85 : f32 to vector<16x32xf32>
    %230 = arith.addf %229, %228 : vector<16x32xf32>
    %231 = arith.divf %229, %230 : vector<16x32xf32>
    %232 = vector.extract_strided_slice %225 {offsets = [0, 32], sizes = [16, 32], strides = [1, 1]} : vector<16x128xf32> to vector<16x32xf32>
    %233 = arith.negf %232 : vector<16x32xf32>
    %234 = math.exp %233 : vector<16x32xf32>
    %cst_86 = arith.constant 1.000000e+00 : f32
    %235 = vector.broadcast %cst_86 : f32 to vector<16x32xf32>
    %236 = arith.addf %235, %234 : vector<16x32xf32>
    %237 = arith.divf %235, %236 : vector<16x32xf32>
    %238 = vector.extract_strided_slice %225 {offsets = [0, 64], sizes = [16, 32], strides = [1, 1]} : vector<16x128xf32> to vector<16x32xf32>
    %239 = vector.extract_strided_slice %225 {offsets = [0, 96], sizes = [16, 32], strides = [1, 1]} : vector<16x128xf32> to vector<16x32xf32>
    %240 = arith.mulf %231, %239 : vector<16x32xf32>
    %241 = arith.addf %238, %240 : vector<16x32xf32>
    %242 = math.tanh %241 : vector<16x32xf32>
    %cst_87 = arith.constant 1.000000e+00 : f32
    %243 = vector.broadcast %cst_87 : f32 to vector<16x32xf32>
    %244 = arith.subf %243, %237 : vector<16x32xf32>
    %245 = arith.mulf %244, %242 : vector<16x32xf32>
    %246 = arith.mulf %237, %214 : vector<16x32xf32>
    %247 = arith.addf %245, %246 : vector<16x32xf32>
    %c7_i32 = arith.constant 7 : i32
    %cst_88 = arith.constant dense<0.000000e+00> : vector<16x128xf32>
    %248 = tpu.matmul %247, %9, %cst_88 {dimension_numbers = #tpu.dot_dimension_numbers<[1], [0], [0], [1], [0, 0, 1, 1], [], []>} : vector<16x32xf32>, vector<32x128xf32>, vector<16x128xf32> -> vector<16x128xf32>
    %249 = arith.addf %16, %248 : vector<16x128xf32>
    %cst_89 = arith.constant dense<0.000000e+00> : vector<16x128xf32>
    %250 = tpu.matmul %247, %6, %cst_89 {dimension_numbers = #tpu.dot_dimension_numbers<[1], [0], [0], [1], [0, 0, 1, 1], [], []>} : vector<16x32xf32>, vector<32x128xf32>, vector<16x128xf32> -> vector<16x128xf32>
    %cst_90 = arith.constant dense<0.000000e+00> : vector<16x128xf32>
    %251 = tpu.matmul %0, %250, %cst_90 {dimension_numbers = #tpu.dot_dimension_numbers<[1], [0], [0], [1], [0, 0, 1, 1], [], []>} : vector<16x16xf32>, vector<16x128xf32>, vector<16x128xf32> -> vector<16x128xf32>
    %252 = arith.addf %249, %251 : vector<16x128xf32>
    %cst_91 = arith.constant dense<0.000000e+00> : vector<16x128xf32>
    %253 = tpu.matmul %247, %7, %cst_91 {dimension_numbers = #tpu.dot_dimension_numbers<[1], [0], [0], [1], [0, 0, 1, 1], [], []>} : vector<16x32xf32>, vector<32x128xf32>, vector<16x128xf32> -> vector<16x128xf32>
    %cst_92 = arith.constant dense<0.000000e+00> : vector<16x128xf32>
    %254 = tpu.matmul %1, %253, %cst_92 {dimension_numbers = #tpu.dot_dimension_numbers<[1], [0], [0], [1], [0, 0, 1, 1], [], []>} : vector<16x16xf32>, vector<16x128xf32>, vector<16x128xf32> -> vector<16x128xf32>
    %255 = arith.addf %252, %254 : vector<16x128xf32>
    %cst_93 = arith.constant dense<0.000000e+00> : vector<16x128xf32>
    %256 = tpu.matmul %247, %8, %cst_93 {dimension_numbers = #tpu.dot_dimension_numbers<[1], [0], [0], [1], [0, 0, 1, 1], [], []>} : vector<16x32xf32>, vector<32x128xf32>, vector<16x128xf32> -> vector<16x128xf32>
    %cst_94 = arith.constant dense<0.000000e+00> : vector<16x128xf32>
    %257 = tpu.matmul %2, %256, %cst_94 {dimension_numbers = #tpu.dot_dimension_numbers<[1], [0], [0], [1], [0, 0, 1, 1], [], []>} : vector<16x16xf32>, vector<16x128xf32>, vector<16x128xf32> -> vector<16x128xf32>
    %258 = arith.addf %255, %257 : vector<16x128xf32>
    %259 = vector.extract_strided_slice %258 {offsets = [0, 0], sizes = [16, 32], strides = [1, 1]} : vector<16x128xf32> to vector<16x32xf32>
    %260 = arith.negf %259 : vector<16x32xf32>
    %261 = math.exp %260 : vector<16x32xf32>
    %cst_95 = arith.constant 1.000000e+00 : f32
    %262 = vector.broadcast %cst_95 : f32 to vector<16x32xf32>
    %263 = arith.addf %262, %261 : vector<16x32xf32>
    %264 = arith.divf %262, %263 : vector<16x32xf32>
    %265 = vector.extract_strided_slice %258 {offsets = [0, 32], sizes = [16, 32], strides = [1, 1]} : vector<16x128xf32> to vector<16x32xf32>
    %266 = arith.negf %265 : vector<16x32xf32>
    %267 = math.exp %266 : vector<16x32xf32>
    %cst_96 = arith.constant 1.000000e+00 : f32
    %268 = vector.broadcast %cst_96 : f32 to vector<16x32xf32>
    %269 = arith.addf %268, %267 : vector<16x32xf32>
    %270 = arith.divf %268, %269 : vector<16x32xf32>
    %271 = vector.extract_strided_slice %258 {offsets = [0, 64], sizes = [16, 32], strides = [1, 1]} : vector<16x128xf32> to vector<16x32xf32>
    %272 = vector.extract_strided_slice %258 {offsets = [0, 96], sizes = [16, 32], strides = [1, 1]} : vector<16x128xf32> to vector<16x32xf32>
    %273 = arith.mulf %264, %272 : vector<16x32xf32>
    %274 = arith.addf %271, %273 : vector<16x32xf32>
    %275 = math.tanh %274 : vector<16x32xf32>
    %cst_97 = arith.constant 1.000000e+00 : f32
    %276 = vector.broadcast %cst_97 : f32 to vector<16x32xf32>
    %277 = arith.subf %276, %270 : vector<16x32xf32>
    %278 = arith.mulf %277, %275 : vector<16x32xf32>
    %279 = arith.mulf %270, %247 : vector<16x32xf32>
    %280 = arith.addf %278, %279 : vector<16x32xf32>
    %cst_98 = arith.constant dense<0.000000e+00> : vector<2x32xf32>
    %281 = tpu.matmul %5, %280, %cst_98 {dimension_numbers = #tpu.dot_dimension_numbers<[1], [0], [0], [1], [0, 0, 1, 1], [], []>} : vector<2x16xf32>, vector<16x32xf32>, vector<2x32xf32> -> vector<2x32xf32>
    %282 = vector.broadcast %12 : vector<1x32xf32> to vector<2x32xf32>
    %283 = arith.mulf %281, %282 : vector<2x32xf32>
    %cst_99 = arith.constant dense<0.000000e+00> : vector<2xf32>
    %284 = vector.multi_reduction <add>, %283, %cst_99 [1] : vector<2x32xf32> to vector<2xf32>
    %285 = vector.shape_cast %284 : vector<2xf32> to vector<2x1xf32>
    %286 = vector.broadcast %13 : vector<1x1xf32> to vector<2x1xf32>
    %287 = arith.addf %285, %286 : vector<2x1xf32>
    %288 = arith.negf %287 : vector<2x1xf32>
    %289 = math.exp %288 : vector<2x1xf32>
    %cst_100 = arith.constant 1.000000e+00 : f32
    %290 = vector.broadcast %cst_100 : f32 to vector<2x1xf32>
    %291 = arith.addf %290, %289 : vector<2x1xf32>
    %292 = arith.divf %290, %291 : vector<2x1xf32>
    %c0_101 = arith.constant 0 : index
    %c0_102 = arith.constant 0 : index
    %293 = vector.load %arg2[%c0_101, %c0_102] : memref<2x1xf32, #tpu.memory_space<vmem>>, vector<2x1xf32>
    tpu.vector_store %arg2[%c0_101, %c0_102], %292 {strides = array<i32>} : memref<2x1xf32, #tpu.memory_space<vmem>>, vector<2x1xf32>,
    return
  }
}

</mosaic_0001>

<llo_original>
// kernel: tpu_custom_call.1
$region0: #{tpu_custom_call.1}
  #allocation0 [shape = 'u32[]', space=smem, size = 0x4, offset = 0x4, fixed_abs, tag = 'smem constant byte address 0x4 - core index']
  #allocation1 [shape = 'u32[72,128]{1,0:T(1,128)}', space=vmem, size = 0x9000, scoped, tag = 'internal scratch']
  %s0 = inlined_call_operand.hbm [shape: f32[16,128], index: 0, kind: input, shape index: {}]
  %s1 = inlined_call_operand.hbm [shape: f32[184,128], index: 1, kind: input, shape index: {}]
  %s2 = inlined_call_operand.vmem [shape: f32[2,1], index: 2, kind: output, shape index: {}]
  %s3 = sld [smem:[#allocation0]]
  $region26: #{tpu_custom_call.1} parent=0
    _
  %s5 = ssub.s32 1, %s3
  %s6 = scalar_select 0, %s5, %s3
  $region1: #{tpu_custom_call.1} parent=0
    #allocation2 [shape = 'u8[8192]{0}', space=vmem, size = 0x2000, scoped, tag = 'input window, operand 0, single buffered']
    #allocation3 [shape = 's32[1]{0}', space=sflag, size = 0x4, scoped, tag = 'scoped memory for tpu_custom_call.1']
    #allocation4 [shape = 'u8[94208]{0}', space=vmem, size = 0x17000, scoped, tag = 'input window, operand 1, single buffered']
    #allocation5 [shape = 's32[1]{0}', space=sflag, size = 0x4, scoped, tag = 'scoped memory for tpu_custom_call.1']
    %7 = vsyncpa [#allocation3], 0
    %8 = vsyncpa [#allocation5], 0
    // Predicated region
    $region2: #{tpu_custom_call.1} parent=1 // pred_check
      _
    $region3: #{tpu_custom_call.1} parent=1 // pred_check_branch
      %10 = sbr.rel (0) target = $region5
    $region4: #{tpu_custom_call.1} parent=1 // pred_region
      %12 = vsyncadd [#allocation3], 0
      %s13 = sshll.u32 %s0, 4
      %s14 = int_to_ptr.hbm [resolvable:$true] %s13
      %s15 = sshll.u32 [#allocation2], 4
      %s16 = int_to_ptr.vmem [resolvable:$true] %s15
      %21 = dma.hbm_to_vmem [thread:$0]  %s14, 256, %s16, [#allocation3], 128, 128, 8
    $region5: #{tpu_custom_call.1} parent=1 // pred_fallthru
      _
    // Predicated region
    $region6: #{tpu_custom_call.1} parent=1 // pred_check
      _
    $region7: #{tpu_custom_call.1} parent=1 // pred_check_branch
      %23 = sbr.rel (0) target = $region9
    $region8: #{tpu_custom_call.1} parent=1 // pred_region
      %25 = vsyncadd [#allocation5], 0
      %s26 = sshll.u32 %s1, 4
      %s27 = int_to_ptr.hbm [resolvable:$true] %s26
      %s28 = sshll.u32 [#allocation4], 4
      %s29 = int_to_ptr.vmem [resolvable:$true] %s28
      %34 = dma.hbm_to_vmem [thread:$0]  %s27, 2944, %s29, [#allocation5], 128, 128, 8
    $region9: #{tpu_custom_call.1} parent=1 // pred_fallthru
      _
    // Predicated region
    $region10: #{tpu_custom_call.1} parent=1 // pred_check
      _
    $region11: #{tpu_custom_call.1} parent=1 // pred_check_branch
      %36 = sbr.rel (0) target = $region13
    $region12: #{tpu_custom_call.1} parent=1 // pred_region
      %38 = dma.done [#allocation3], 256
    $region13: #{tpu_custom_call.1} parent=1 // pred_fallthru
      _
    // Predicated region
    $region14: #{tpu_custom_call.1} parent=1 // pred_check
      _
    $region15: #{tpu_custom_call.1} parent=1 // pred_check_branch
      %40 = sbr.rel (0) target = $region17
    $region16: #{tpu_custom_call.1} parent=1 // pred_region
      %42 = dma.done [#allocation5], 2944
    $region17: #{tpu_custom_call.1} parent=1 // pred_fallthru
      _
    %v43 = vld [vmem:[#allocation2] sm:$0xff]
    %v44 = vld [vmem:[#allocation2 + $0x8] sm:$0xff]
    %v45 = vld [vmem:[#allocation2] sm:$0x3]
    %v46 = vld [vmem:[#allocation4] sm:$0xff]
    %v47 = vld [vmem:[#allocation4 + $0x8] sm:$0xff]
    %v48 = vld [vmem:[#allocation4 + $0x10] sm:$0xff]
    %v49 = vld [vmem:[#allocation4 + $0x18] sm:$0xff]
    %v50 = vld [vmem:[#allocation4 + $0x20] sm:$0xff]
    %v51 = vld [vmem:[#allocation4 + $0x28] sm:$0xff]
    %v52 = vld [vmem:[#allocation4 + $0x30] sm:$0xff]
    %v53 = vld [vmem:[#allocation4 + $0x38] sm:$0xff]
    %v54 = vld [vmem:[#allocation4 + $0x40] sm:$0xff]
    %v55 = vld [vmem:[#allocation4 + $0x48] sm:$0xff]
    %v56 = vld [vmem:[#allocation4 + $0x50] sm:$0xff]
    %v57 = vld [vmem:[#allocation4 + $0x58] sm:$0xff]
    %v58 = vld [vmem:[#allocation4 + $0x60] sm:$0xff]
    %v59 = vld [vmem:[#allocation4 + $0x68] sm:$0xff]
    %v60 = vld [vmem:[#allocation4 + $0x70] sm:$0xff]
    %v61 = vld [vmem:[#allocation4 + $0x78] sm:$0xff]
    %v62 = vld [vmem:[#allocation4 + $0x80] sm:$0xff]
    %v63 = vld [vmem:[#allocation4 + $0x88] sm:$0xff]
    %v64 = vld [vmem:[#allocation4 + $0x90] sm:$0xff]
    %v65 = vld [vmem:[#allocation4 + $0x98] sm:$0xff]
    %v66 = vld [vmem:[#allocation4 + $0xa0] sm:$0xff]
    %v67 = vld [vmem:[#allocation4 + $0xa8] sm:$0xff]
    %v68 = vld [vmem:[#allocation4 + $0xb0] sm:$0x1]
    %v69 = vld [vmem:[#allocation4 + $0xb1] sm:$0x1]
    %v70 = vperm.slane %v68, 0
    %vm71 = vcmask 392192
    %v73 = vsel %vm71, %v43, 0
    %v76 = vsel %vm71, %v44, 0
    %78 = vmatpush.msra.mxu0 0.0
    %79 = vmatpush.msra.mxu0 0.0
    %80 = vmatpush.msra.mxu0 0.0
    %81 = vmatpush.msra.mxu0 0.0
    %82 = vmatpush.msra.mxu0 0.0
    %83 = vmatpush.msra.mxu0 0.0
    %84 = vmatpush.msra.mxu0 0.0
    %85 = vmatpush.msra.mxu0 0.0
    %86 = vmatpush.msra.mxu0 0.0
    %87 = vmatpush.msra.mxu0 0.0
    %88 = vmatpush.msra.mxu0 %v67
    %89 = vmatpush.msra.mxu0 %v66
    %90 = vmatpush.msra.mxu0 %v65
    %91 = vmatpush.msra.mxu0 %v64
    %92 = vmatpush.msra.mxu0 %v63
    %93 = vmatpush.msra.mxu0 %v62
    %94 = vmatmul.f32.gmra.mxu0 %v73
    %v95 = vpop.f32.mrf.mxu0
    %v96 = vadd.f32 %v70, %v95
    %97 = vmatmul.f32.gmra.mxu0 %v76
    %v98 = vpop.f32.mrf.mxu0
    %v99 = vadd.f32 %v70, %v98
    %100 = vdwg.mxu0
    %101 = vrot.lane.b32.xlu0 %v43, 80
    %v102 = vpop.permute.xlu0 %101
    %103 = vrot.lane.b32.xlu0 %v44, 80
    %v104 = vpop.permute.xlu0 %103
    %vm105 = vcmask 261120
    %v106 = vsel %vm105, %v102, 0
    %v108 = vsel %vm105, %v104, 0
    %110 = vmatpush.msra.mxu0 0.0
    %111 = vmatpush.msra.mxu0 0.0
    %112 = vmatpush.msra.mxu0 0.0
    %113 = vmatpush.msra.mxu0 0.0
    %114 = vmatpush.msra.mxu0 0.0
    %115 = vmatpush.msra.mxu0 0.0
    %116 = vmatpush.msra.mxu0 0.0
    %117 = vmatpush.msra.mxu0 0.0
    %118 = vmatpush.msra.mxu0 0.0
    %119 = vmatpush.msra.mxu0 0.0
    %120 = vmatpush.msra.mxu0 0.0
    %121 = vmatpush.msra.mxu0 0.0
    %122 = vmatpush.msra.mxu0 %v61
    %123 = vmatpush.msra.mxu0 %v60
    %124 = vmatpush.msra.mxu0 %v59
    %125 = vmatpush.msra.mxu0 %v58
    %126 = vmatmul.f32.gmra.mxu0 %v106
    %v127 = vpop.f32.mrf.mxu0
    %v128 = vadd.f32 0.0, %v127
    %129 = vmatmul.f32.gmra.mxu0 %v108
    %v130 = vpop.f32.mrf.mxu0
    %v131 = vadd.f32 0.0, %v130
    %132 = vdwg.mxu0
    %v133 = vadd.f32 %v96, %v128
    %v134 = vadd.f32 %v99, %v131
    %135 = vmatpush.msra.mxu0 0.0
    %136 = vmatpush.msra.mxu0 0.0
    %137 = vmatpush.msra.mxu0 0.0
    %138 = vmatpush.msra.mxu0 0.0
    %139 = vmatpush.msra.mxu0 0.0
    %140 = vmatpush.msra.mxu0 0.0
    %141 = vmatpush.msra.mxu0 0.0
    %142 = vmatpush.msra.mxu0 0.0
    %143 = vmatpush.msra.mxu0 0.0
    %144 = vmatpush.msra.mxu0 0.0
    %145 = vmatpush.msra.mxu0 0.0
    %146 = vmatpush.msra.mxu0 0.0
    %147 = vmatpush.msra.mxu0 %v49
    %148 = vmatpush.msra.mxu0 %v48
    %149 = vmatpush.msra.mxu0 %v47
    %150 = vmatpush.msra.mxu0 %v46
    %151 = vmatmul.f32.gmra.mxu0 %v106
    %v152 = vpop.f32.mrf.mxu0
    %v153 = vadd.f32 0.0, %v152
    %154 = vmatmul.f32.gmra.mxu0 %v108
    %v155 = vpop.f32.mrf.mxu0
    %v156 = vadd.f32 0.0, %v155
    %157 = vdwg.mxu0
    %vm158 = vcmask 130048
    %v159 = vsel %vm158, %v43, 0
    %v161 = vsel %vm158, %v44, 0
    %163 = vmatpush.msra.mxu0 0.0
    %164 = vmatpush.msra.mxu0 0.0
    %165 = vmatpush.msra.mxu0 0.0
    %166 = vmatpush.msra.mxu0 0.0
    %167 = vmatpush.msra.mxu0 0.0
    %168 = vmatpush.msra.mxu0 0.0
    %169 = vmatpush.msra.mxu0 0.0
    %170 = vmatpush.msra.mxu0 0.0
    %171 = vmatpush.msra.mxu0 0.0
    %172 = vmatpush.msra.mxu0 0.0
    %173 = vmatpush.msra.mxu0 0.0
    %174 = vmatpush.msra.mxu0 0.0
    %175 = vmatpush.msra.mxu0 0.0
    %176 = vmatpush.msra.mxu0 0.0
    %177 = vmatpush.msra.mxu0 %v156
    %178 = vmatpush.msra.mxu0 %v153
    %179 = vmatmul.f32.gmra.mxu0 %v159
    %v180 = vpop.f32.mrf.mxu0
    %v181 = vadd.f32 0.0, %v180
    %182 = vmatmul.f32.gmra.mxu0 %v161
    %v183 = vpop.f32.mrf.mxu0
    %v184 = vadd.f32 0.0, %v183
    %185 = vdwg.mxu0
    %v186 = vadd.f32 %v133, %v181
    %v187 = vadd.f32 %v134, %v184
    %188 = vmatpush.msra.mxu0 0.0
    %189 = vmatpush.msra.mxu0 0.0
    %190 = vmatpush.msra.mxu0 0.0
    %191 = vmatpush.msra.mxu0 0.0
    %192 = vmatpush.msra.mxu0 0.0
    %193 = vmatpush.msra.mxu0 0.0
    %194 = vmatpush.msra.mxu0 0.0
    %195 = vmatpush.msra.mxu0 0.0
    %196 = vmatpush.msra.mxu0 0.0
    %197 = vmatpush.msra.mxu0 0.0
    %198 = vmatpush.msra.mxu0 0.0
    %199 = vmatpush.msra.mxu0 0.0
    %200 = vmatpush.msra.mxu0 %v53
    %201 = vmatpush.msra.mxu0 %v52
    %202 = vmatpush.msra.mxu0 %v51
    %203 = vmatpush.msra.mxu0 %v50
    %204 = vmatmul.f32.gmra.mxu0 %v106
    %v205 = vpop.f32.mrf.mxu0
    %v206 = vadd.f32 0.0, %v205
    %207 = vmatmul.f32.gmra.mxu0 %v108
    %v208 = vpop.f32.mrf.mxu0
    %v209 = vadd.f32 0.0, %v208
    %210 = vdwg.mxu0
    %211 = vrot.lane.b32.xlu0 %v43, 112
    %v212 = vpop.permute.xlu0 %211
    %213 = vrot.lane.b32.xlu0 %v44, 112
    %v214 = vpop.permute.xlu0 %213
    %v215 = vsel %vm158, %v212, 0
    %v217 = vsel %vm158, %v214, 0
    %219 = vmatpush.msra.mxu0 0.0
    %220 = vmatpush.msra.mxu0 0.0
    %221 = vmatpush.msra.mxu0 0.0
    %222 = vmatpush.msra.mxu0 0.0
    %223 = vmatpush.msra.mxu0 0.0
    %224 = vmatpush.msra.mxu0 0.0
    %225 = vmatpush.msra.mxu0 0.0
    %226 = vmatpush.msra.mxu0 0.0
    %227 = vmatpush.msra.mxu0 0.0
    %228 = vmatpush.msra.mxu0 0.0
    %229 = vmatpush.msra.mxu0 0.0
    %230 = vmatpush.msra.mxu0 0.0
    %231 = vmatpush.msra.mxu0 0.0
    %232 = vmatpush.msra.mxu0 0.0
    %233 = vmatpush.msra.mxu0 %v209
    %234 = vmatpush.msra.mxu0 %v206
    %235 = vmatmul.f32.gmra.mxu0 %v215
    %v236 = vpop.f32.mrf.mxu0
    %v237 = vadd.f32 0.0, %v236
    %238 = vmatmul.f32.gmra.mxu0 %v217
    %v239 = vpop.f32.mrf.mxu0
    %v240 = vadd.f32 0.0, %v239
    %241 = vdwg.mxu0
    %v242 = vadd.f32 %v186, %v237
    %v243 = vadd.f32 %v187, %v240
    %244 = vmatpush.msra.mxu0 0.0
    %245 = vmatpush.msra.mxu0 0.0
    %246 = vmatpush.msra.mxu0 0.0
    %247 = vmatpush.msra.mxu0 0.0
    %248 = vmatpush.msra.mxu0 0.0
    %249 = vmatpush.msra.mxu0 0.0
    %250 = vmatpush.msra.mxu0 0.0
    %251 = vmatpush.msra.mxu0 0.0
    %252 = vmatpush.msra.mxu0 0.0
    %253 = vmatpush.msra.mxu0 0.0
    %254 = vmatpush.msra.mxu0 0.0
    %255 = vmatpush.msra.mxu0 0.0
    %256 = vmatpush.msra.mxu0 %v57
    %257 = vmatpush.msra.mxu0 %v56
    %258 = vmatpush.msra.mxu0 %v55
    %259 = vmatpush.msra.mxu0 %v54
    %260 = vmatmul.f32.gmra.mxu0 %v106
    %v261 = vpop.f32.mrf.mxu0
    %v262 = vadd.f32 0.0, %v261
    %263 = vmatmul.f32.gmra.mxu0 %v108
    %v264 = vpop.f32.mrf.mxu0
    %v265 = vadd.f32 0.0, %v264
    %266 = vdwg.mxu0
    %267 = vrot.lane.b32.xlu0 %v43, 96
    %v268 = vpop.permute.xlu0 %267
    %269 = vrot.lane.b32.xlu0 %v44, 96
    %v270 = vpop.permute.xlu0 %269
    %v271 = vsel %vm158, %v268, 0
    %v273 = vsel %vm158, %v270, 0
    %275 = vmatpush.msra.mxu0 0.0
    %276 = vmatpush.msra.mxu0 0.0
    %277 = vmatpush.msra.mxu0 0.0
    %278 = vmatpush.msra.mxu0 0.0
    %279 = vmatpush.msra.mxu0 0.0
    %280 = vmatpush.msra.mxu0 0.0
    %281 = vmatpush.msra.mxu0 0.0
    %282 = vmatpush.msra.mxu0 0.0
    %283 = vmatpush.msra.mxu0 0.0
    %284 = vmatpush.msra.mxu0 0.0
    %285 = vmatpush.msra.mxu0 0.0
    %286 = vmatpush.msra.mxu0 0.0
    %287 = vmatpush.msra.mxu0 0.0
    %288 = vmatpush.msra.mxu0 0.0
    %289 = vmatpush.msra.mxu0 %v265
    %290 = vmatpush.msra.mxu0 %v262
    %291 = vmatmul.f32.gmra.mxu0 %v271
    %v292 = vpop.f32.mrf.mxu0
    %v293 = vadd.f32 0.0, %v292
    %294 = vmatmul.f32.gmra.mxu0 %v273
    %v295 = vpop.f32.mrf.mxu0
    %v296 = vadd.f32 0.0, %v295
    %297 = vdwg.mxu0
    %v298 = vadd.f32 %v242, %v293
    %v299 = vadd.f32 %v243, %v296
    %v300 = vxor.u32 %v298, 2147483648
    %v301 = vxor.u32 %v299, 2147483648
    %v302 = vmul.f32 %v300, 1.442695
    %v303 = vpow.pop %v302
    %v304 = vmul.f32 %v301, 1.442695
    %v305 = vpow.pop %v304
    %v306 = vadd.f32 %v303, 1.0
    %v307 = vadd.f32 %v305, 1.0
    %v308 = vrcp.pop %v306
    %v309 = vmul.f32 %v306, %v308
    %v310 = vsub.f32 1.0, %v309
    %v311 = vmul.f32 %v308, %v310
    %v312 = vadd.f32 %v308, %v311
    %vm313 = vweird.f32 %v306
    %vm314 = vweird.f32 %v308
    %vm315 = vmor %vm313, %vm314
    %v316 = vsel %vm315, %v308, %v312
    %v317 = vand.u32 2147483647, %v306
    %vm318 = vcmp.eq.f32.partialorder %v317, 8.507059e+37
    %v319 = vand.u32 %v306, 2147483648
    %v320 = vor.u32 1.1754944e-38, %v319
    %v321 = vsel %vm318, %v320, %v316
    %v322 = vmul.f32 1.0, %v321
    %v323 = vrcp.pop %v307
    %v324 = vmul.f32 %v307, %v323
    %v325 = vsub.f32 1.0, %v324
    %v326 = vmul.f32 %v323, %v325
    %v327 = vadd.f32 %v323, %v326
    %vm328 = vweird.f32 %v307
    %vm329 = vweird.f32 %v323
    %vm330 = vmor %vm328, %vm329
    %v331 = vsel %vm330, %v323, %v327
    %v332 = vand.u32 2147483647, %v307
    %vm333 = vcmp.eq.f32.partialorder %v332, 8.507059e+37
    %v334 = vand.u32 %v307, 2147483648
    %v335 = vor.u32 1.1754944e-38, %v334
    %v336 = vsel %vm333, %v335, %v331
    %v337 = vmul.f32 1.0, %v336
    %340 = vrot.lane.b32.xlu0 %v298, 32
    %v341 = vpop.permute.xlu0 %340
    %342 = vrot.lane.b32.xlu0 %v299, 32
    %v343 = vpop.permute.xlu0 %342
    %v346 = vmul.f32 %v322, %v341
    %v347 = vmul.f32 %v337, %v343
    %350 = vrot.lane.b32.xlu0 %v346, 64
    %v351 = vpop.permute.xlu0 %350
    %352 = vrot.lane.b32.xlu0 %v347, 64
    %v353 = vpop.permute.xlu0 %352
    %v356 = vadd.f32 %v298, %v351
    %v357 = vadd.f32 %v299, %v353
    %v358 = vtanh.pop %v356
    %v359 = vtanh.pop %v357
    %v360 = vsub.f32 1.0, %v322
    %v361 = vsub.f32 1.0, %v337
    %364 = vrot.lane.b32.xlu0 %v358, 96
    %v365 = vpop.permute.xlu0 %364
    %366 = vrot.lane.b32.xlu0 %v359, 96
    %v367 = vpop.permute.xlu0 %366
    %v370 = vmul.f32 %v360, %v365
    %v371 = vmul.f32 %v361, %v367
    %v374 = vmul.f32 %v322, %v212
    %v375 = vmul.f32 %v337, %v214
    %v376 = vadd.f32 %v370, %v374
    %v377 = vadd.f32 %v371, %v375
    %380 = vrot.lane.b32.xlu0 %v376, 96
    %v381 = vpop.permute.xlu0 %380
    %382 = vrot.lane.b32.xlu0 %v377, 96
    %v383 = vpop.permute.xlu0 %382
    %v384 = vsel %vm105, %v381, 0
    %v386 = vsel %vm105, %v383, 0
    %388 = vmatpush.msra.mxu0 0.0
    %389 = vmatpush.msra.mxu0 0.0
    %390 = vmatpush.msra.mxu0 0.0
    %391 = vmatpush.msra.mxu0 0.0
    %392 = vmatpush.msra.mxu0 0.0
    %393 = vmatpush.msra.mxu0 0.0
    %394 = vmatpush.msra.mxu0 0.0
    %395 = vmatpush.msra.mxu0 0.0
    %396 = vmatpush.msra.mxu0 0.0
    %397 = vmatpush.msra.mxu0 0.0
    %398 = vmatpush.msra.mxu0 0.0
    %399 = vmatpush.msra.mxu0 0.0
    %400 = vmatpush.msra.mxu0 %v61
    %401 = vmatpush.msra.mxu0 %v60
    %402 = vmatpush.msra.mxu0 %v59
    %403 = vmatpush.msra.mxu0 %v58
    %404 = vmatmul.f32.gmra.mxu0 %v384
    %v405 = vpop.f32.mrf.mxu0
    %v406 = vadd.f32 0.0, %v405
    %407 = vmatmul.f32.gmra.mxu0 %v386
    %v408 = vpop.f32.mrf.mxu0
    %v409 = vadd.f32 0.0, %v408
    %410 = vdwg.mxu0
    %v411 = vadd.f32 %v96, %v406
    %v412 = vadd.f32 %v99, %v409
    %413 = vmatpush.msra.mxu0 0.0
    %414 = vmatpush.msra.mxu0 0.0
    %415 = vmatpush.msra.mxu0 0.0
    %416 = vmatpush.msra.mxu0 0.0
    %417 = vmatpush.msra.mxu0 0.0
    %418 = vmatpush.msra.mxu0 0.0
    %419 = vmatpush.msra.mxu0 0.0
    %420 = vmatpush.msra.mxu0 0.0
    %421 = vmatpush.msra.mxu0 0.0
    %422 = vmatpush.msra.mxu0 0.0
    %423 = vmatpush.msra.mxu0 0.0
    %424 = vmatpush.msra.mxu0 0.0
    %425 = vmatpush.msra.mxu0 %v49
    %426 = vmatpush.msra.mxu0 %v48
    %427 = vmatpush.msra.mxu0 %v47
    %428 = vmatpush.msra.mxu0 %v46
    %429 = vmatmul.f32.gmra.mxu0 %v384
    %v430 = vpop.f32.mrf.mxu0
    %v431 = vadd.f32 0.0, %v430
    %432 = vmatmul.f32.gmra.mxu0 %v386
    %v433 = vpop.f32.mrf.mxu0
    %v434 = vadd.f32 0.0, %v433
    %435 = vdwg.mxu0
    %436 = vmatpush.msra.mxu0 0.0
    %437 = vmatpush.msra.mxu0 0.0
    %438 = vmatpush.msra.mxu0 0.0
    %439 = vmatpush.msra.mxu0 0.0
    %440 = vmatpush.msra.mxu0 0.0
    %441 = vmatpush.msra.mxu0 0.0
    %442 = vmatpush.msra.mxu0 0.0
    %443 = vmatpush.msra.mxu0 0.0
    %444 = vmatpush.msra.mxu0 0.0
    %445 = vmatpush.msra.mxu0 0.0
    %446 = vmatpush.msra.mxu0 0.0
    %447 = vmatpush.msra.mxu0 0.0
    %448 = vmatpush.msra.mxu0 0.0
    %449 = vmatpush.msra.mxu0 0.0
    %450 = vmatpush.msra.mxu0 %v434
    %451 = vmatpush.msra.mxu0 %v431
    %452 = vmatmul.f32.gmra.mxu0 %v159
    %v453 = vpop.f32.mrf.mxu0
    %v454 = vadd.f32 0.0, %v453
    %455 = vmatmul.f32.gmra.mxu0 %v161
    %v456 = vpop.f32.mrf.mxu0
    %v457 = vadd.f32 0.0, %v456
    %458 = vdwg.mxu0
    %v459 = vadd.f32 %v411, %v454
    %v460 = vadd.f32 %v412, %v457
    %461 = vmatpush.msra.mxu0 0.0
    %462 = vmatpush.msra.mxu0 0.0
    %463 = vmatpush.msra.mxu0 0.0
    %464 = vmatpush.msra.mxu0 0.0
    %465 = vmatpush.msra.mxu0 0.0
    %466 = vmatpush.msra.mxu0 0.0
    %467 = vmatpush.msra.mxu0 0.0
    %468 = vmatpush.msra.mxu0 0.0
    %469 = vmatpush.msra.mxu0 0.0
    %470 = vmatpush.msra.mxu0 0.0
    %471 = vmatpush.msra.mxu0 0.0
    %472 = vmatpush.msra.mxu0 0.0
    %473 = vmatpush.msra.mxu0 %v53
    %474 = vmatpush.msra.mxu0 %v52
    %475 = vmatpush.msra.mxu0 %v51
    %476 = vmatpush.msra.mxu0 %v50
    %477 = vmatmul.f32.gmra.mxu0 %v384
    %v478 = vpop.f32.mrf.mxu0
    %v479 = vadd.f32 0.0, %v478
    %480 = vmatmul.f32.gmra.mxu0 %v386
    %v481 = vpop.f32.mrf.mxu0
    %v482 = vadd.f32 0.0, %v481
    %483 = vdwg.mxu0
    %484 = vmatpush.msra.mxu0 0.0
    %485 = vmatpush.msra.mxu0 0.0
    %486 = vmatpush.msra.mxu0 0.0
    %487 = vmatpush.msra.mxu0 0.0
    %488 = vmatpush.msra.mxu0 0.0
    %489 = vmatpush.msra.mxu0 0.0
    %490 = vmatpush.msra.mxu0 0.0
    %491 = vmatpush.msra.mxu0 0.0
    %492 = vmatpush.msra.mxu0 0.0
    %493 = vmatpush.msra.mxu0 0.0
    %494 = vmatpush.msra.mxu0 0.0
    %495 = vmatpush.msra.mxu0 0.0
    %496 = vmatpush.msra.mxu0 0.0
    %497 = vmatpush.msra.mxu0 0.0
    %498 = vmatpush.msra.mxu0 %v482
    %499 = vmatpush.msra.mxu0 %v479
    %500 = vmatmul.f32.gmra.mxu0 %v215
    %v501 = vpop.f32.mrf.mxu0
    %v502 = vadd.f32 0.0, %v501
    %503 = vmatmul.f32.gmra.mxu0 %v217
    %v504 = vpop.f32.mrf.mxu0
    %v505 = vadd.f32 0.0, %v504
    %506 = vdwg.mxu0
    %v507 = vadd.f32 %v459, %v502
    %v508 = vadd.f32 %v460, %v505
    %509 = vmatpush.msra.mxu0 0.0
    %510 = vmatpush.msra.mxu0 0.0
    %511 = vmatpush.msra.mxu0 0.0
    %512 = vmatpush.msra.mxu0 0.0
    %513 = vmatpush.msra.mxu0 0.0
    %514 = vmatpush.msra.mxu0 0.0
    %515 = vmatpush.msra.mxu0 0.0
    %516 = vmatpush.msra.mxu0 0.0
    %517 = vmatpush.msra.mxu0 0.0
    %518 = vmatpush.msra.mxu0 0.0
    %519 = vmatpush.msra.mxu0 0.0
    %520 = vmatpush.msra.mxu0 0.0
    %521 = vmatpush.msra.mxu0 %v57
    %522 = vmatpush.msra.mxu0 %v56
    %523 = vmatpush.msra.mxu0 %v55
    %524 = vmatpush.msra.mxu0 %v54
    %525 = vmatmul.f32.gmra.mxu0 %v384
    %v526 = vpop.f32.mrf.mxu0
    %v527 = vadd.f32 0.0, %v526
    %528 = vmatmul.f32.gmra.mxu0 %v386
    %v529 = vpop.f32.mrf.mxu0
    %v530 = vadd.f32 0.0, %v529
    %531 = vdwg.mxu0
    %532 = vmatpush.msra.mxu0 0.0
    %533 = vmatpush.msra.mxu0 0.0
    %534 = vmatpush.msra.mxu0 0.0
    %535 = vmatpush.msra.mxu0 0.0
    %536 = vmatpush.msra.mxu0 0.0
    %537 = vmatpush.msra.mxu0 0.0
    %538 = vmatpush.msra.mxu0 0.0
    %539 = vmatpush.msra.mxu0 0.0
    %540 = vmatpush.msra.mxu0 0.0
    %541 = vmatpush.msra.mxu0 0.0
    %542 = vmatpush.msra.mxu0 0.0
    %543 = vmatpush.msra.mxu0 0.0
    %544 = vmatpush.msra.mxu0 0.0
    %545 = vmatpush.msra.mxu0 0.0
    %546 = vmatpush.msra.mxu0 %v530
    %547 = vmatpush.msra.mxu0 %v527
    %548 = vmatmul.f32.gmra.mxu0 %v271
    %v549 = vpop.f32.mrf.mxu0
    %v550 = vadd.f32 0.0, %v549
    %551 = vmatmul.f32.gmra.mxu0 %v273
    %v552 = vpop.f32.mrf.mxu0
    %v553 = vadd.f32 0.0, %v552
    %554 = vdwg.mxu0
    %v555 = vadd.f32 %v507, %v550
    %v556 = vadd.f32 %v508, %v553
    %v557 = vxor.u32 %v555, 2147483648
    %v558 = vxor.u32 %v556, 2147483648
    %v559 = vmul.f32 %v557, 1.442695
    %v560 = vpow.pop %v559
    %v561 = vmul.f32 %v558, 1.442695
    %v562 = vpow.pop %v561
    %v563 = vadd.f32 %v560, 1.0
    %v564 = vadd.f32 %v562, 1.0
    %v565 = vrcp.pop %v563
    %v566 = vmul.f32 %v563, %v565
    %v567 = vsub.f32 1.0, %v566
    %v568 = vmul.f32 %v565, %v567
    %v569 = vadd.f32 %v565, %v568
    %vm570 = vweird.f32 %v563
    %vm571 = vweird.f32 %v565
    %vm572 = vmor %vm570, %vm571
    %v573 = vsel %vm572, %v565, %v569
    %v574 = vand.u32 2147483647, %v563
    %vm575 = vcmp.eq.f32.partialorder %v574, 8.507059e+37
    %v576 = vand.u32 %v563, 2147483648
    %v577 = vor.u32 1.1754944e-38, %v576
    %v578 = vsel %vm575, %v577, %v573
    %v579 = vmul.f32 1.0, %v578
    %v580 = vrcp.pop %v564
    %v581 = vmul.f32 %v564, %v580
    %v582 = vsub.f32 1.0, %v581
    %v583 = vmul.f32 %v580, %v582
    %v584 = vadd.f32 %v580, %v583
    %vm585 = vweird.f32 %v564
    %vm586 = vweird.f32 %v580
    %vm587 = vmor %vm585, %vm586
    %v588 = vsel %vm587, %v580, %v584
    %v589 = vand.u32 2147483647, %v564
    %vm590 = vcmp.eq.f32.partialorder %v589, 8.507059e+37
    %v591 = vand.u32 %v564, 2147483648
    %v592 = vor.u32 1.1754944e-38, %v591
    %v593 = vsel %vm590, %v592, %v588
    %v594 = vmul.f32 1.0, %v593
    %597 = vrot.lane.b32.xlu0 %v555, 32
    %v598 = vpop.permute.xlu0 %597
    %599 = vrot.lane.b32.xlu0 %v556, 32
    %v600 = vpop.permute.xlu0 %599
    %v603 = vmul.f32 %v579, %v598
    %v604 = vmul.f32 %v594, %v600
    %607 = vrot.lane.b32.xlu0 %v603, 64
    %v608 = vpop.permute.xlu0 %607
    %609 = vrot.lane.b32.xlu0 %v604, 64
    %v610 = vpop.permute.xlu0 %609
    %v613 = vadd.f32 %v555, %v608
    %v614 = vadd.f32 %v556, %v610
    %v615 = vtanh.pop %v613
    %v616 = vtanh.pop %v614
    %v617 = vsub.f32 1.0, %v579
    %v618 = vsub.f32 1.0, %v594
    %621 = vrot.lane.b32.xlu0 %v615, 96
    %v622 = vpop.permute.xlu0 %621
    %623 = vrot.lane.b32.xlu0 %v616, 96
    %v624 = vpop.permute.xlu0 %623
    %v627 = vmul.f32 %v617, %v622
    %v628 = vmul.f32 %v618, %v624
    %v629 = vmul.f32 %v579, %v376
    %v630 = vmul.f32 %v594, %v377
    %v631 = vadd.f32 %v627, %v629
    %v632 = vadd.f32 %v628, %v630
    %635 = vrot.lane.b32.xlu0 %v631, 96
    %v636 = vpop.permute.xlu0 %635
    %637 = vrot.lane.b32.xlu0 %v632, 96
    %v638 = vpop.permute.xlu0 %637
    %v639 = vsel %vm105, %v636, 0
    %v641 = vsel %vm105, %v638, 0
    %643 = vmatpush.msra.mxu0 0.0
    %644 = vmatpush.msra.mxu0 0.0
    %645 = vmatpush.msra.mxu0 0.0
    %646 = vmatpush.msra.mxu0 0.0
    %647 = vmatpush.msra.mxu0 0.0
    %648 = vmatpush.msra.mxu0 0.0
    %649 = vmatpush.msra.mxu0 0.0
    %650 = vmatpush.msra.mxu0 0.0
    %651 = vmatpush.msra.mxu0 0.0
    %652 = vmatpush.msra.mxu0 0.0
    %653 = vmatpush.msra.mxu0 0.0
    %654 = vmatpush.msra.mxu0 0.0
    %655 = vmatpush.msra.mxu0 %v61
    %656 = vmatpush.msra.mxu0 %v60
    %657 = vmatpush.msra.mxu0 %v59
    %658 = vmatpush.msra.mxu0 %v58
    %659 = vmatmul.f32.gmra.mxu0 %v639
    %v660 = vpop.f32.mrf.mxu0
    %v661 = vadd.f32 0.0, %v660
    %662 = vmatmul.f32.gmra.mxu0 %v641
    %v663 = vpop.f32.mrf.mxu0
    %v664 = vadd.f32 0.0, %v663
    %665 = vdwg.mxu0
    %v666 = vadd.f32 %v96, %v661
    %v667 = vadd.f32 %v99, %v664
    %668 = vmatpush.msra.mxu0 0.0
    %669 = vmatpush.msra.mxu0 0.0
    %670 = vmatpush.msra.mxu0 0.0
    %671 = vmatpush.msra.mxu0 0.0
    %672 = vmatpush.msra.mxu0 0.0
    %673 = vmatpush.msra.mxu0 0.0
    %674 = vmatpush.msra.mxu0 0.0
    %675 = vmatpush.msra.mxu0 0.0
    %676 = vmatpush.msra.mxu0 0.0
    %677 = vmatpush.msra.mxu0 0.0
    %678 = vmatpush.msra.mxu0 0.0
    %679 = vmatpush.msra.mxu0 0.0
    %680 = vmatpush.msra.mxu0 %v49
    %681 = vmatpush.msra.mxu0 %v48
    %682 = vmatpush.msra.mxu0 %v47
    %683 = vmatpush.msra.mxu0 %v46
    %684 = vmatmul.f32.gmra.mxu0 %v639
    %v685 = vpop.f32.mrf.mxu0
    %v686 = vadd.f32 0.0, %v685
    %687 = vmatmul.f32.gmra.mxu0 %v641
    %v688 = vpop.f32.mrf.mxu0
    %v689 = vadd.f32 0.0, %v688
    %690 = vdwg.mxu0
    %691 = vmatpush.msra.mxu0 0.0
    %692 = vmatpush.msra.mxu0 0.0
    %693 = vmatpush.msra.mxu0 0.0
    %694 = vmatpush.msra.mxu0 0.0
    %695 = vmatpush.msra.mxu0 0.0
    %696 = vmatpush.msra.mxu0 0.0
    %697 = vmatpush.msra.mxu0 0.0
    %698 = vmatpush.msra.mxu0 0.0
    %699 = vmatpush.msra.mxu0 0.0
    %700 = vmatpush.msra.mxu0 0.0
    %701 = vmatpush.msra.mxu0 0.0
    %702 = vmatpush.msra.mxu0 0.0
    %703 = vmatpush.msra.mxu0 0.0
    %704 = vmatpush.msra.mxu0 0.0
    %705 = vmatpush.msra.mxu0 %v689
    %706 = vmatpush.msra.mxu0 %v686
    %707 = vmatmul.f32.gmra.mxu0 %v159
    %v708 = vpop.f32.mrf.mxu0
    %v709 = vadd.f32 0.0, %v708
    %710 = vmatmul.f32.gmra.mxu0 %v161
    %v711 = vpop.f32.mrf.mxu0
    %v712 = vadd.f32 0.0, %v711
    %713 = vdwg.mxu0
    %v714 = vadd.f32 %v666, %v709
    %v715 = vadd.f32 %v667, %v712
    %716 = vmatpush.msra.mxu0 0.0
    %717 = vmatpush.msra.mxu0 0.0
    %718 = vmatpush.msra.mxu0 0.0
    %719 = vmatpush.msra.mxu0 0.0
    %720 = vmatpush.msra.mxu0 0.0
    %721 = vmatpush.msra.mxu0 0.0
    %722 = vmatpush.msra.mxu0 0.0
    %723 = vmatpush.msra.mxu0 0.0
    %724 = vmatpush.msra.mxu0 0.0
    %725 = vmatpush.msra.mxu0 0.0
    %726 = vmatpush.msra.mxu0 0.0
    %727 = vmatpush.msra.mxu0 0.0
    %728 = vmatpush.msra.mxu0 %v53
    %729 = vmatpush.msra.mxu0 %v52
    %730 = vmatpush.msra.mxu0 %v51
    %731 = vmatpush.msra.mxu0 %v50
    %732 = vmatmul.f32.gmra.mxu0 %v639
    %v733 = vpop.f32.mrf.mxu0
    %v734 = vadd.f32 0.0, %v733
    %735 = vmatmul.f32.gmra.mxu0 %v641
    %v736 = vpop.f32.mrf.mxu0
    %v737 = vadd.f32 0.0, %v736
    %738 = vdwg.mxu0
    %739 = vmatpush.msra.mxu0 0.0
    %740 = vmatpush.msra.mxu0 0.0
    %741 = vmatpush.msra.mxu0 0.0
    %742 = vmatpush.msra.mxu0 0.0
    %743 = vmatpush.msra.mxu0 0.0
    %744 = vmatpush.msra.mxu0 0.0
    %745 = vmatpush.msra.mxu0 0.0
    %746 = vmatpush.msra.mxu0 0.0
    %747 = vmatpush.msra.mxu0 0.0
    %748 = vmatpush.msra.mxu0 0.0
    %749 = vmatpush.msra.mxu0 0.0
    %750 = vmatpush.msra.mxu0 0.0
    %751 = vmatpush.msra.mxu0 0.0
    %752 = vmatpush.msra.mxu0 0.0
    %753 = vmatpush.msra.mxu0 %v737
    %754 = vmatpush.msra.mxu0 %v734
    %755 = vmatmul.f32.gmra.mxu0 %v215
    %v756 = vpop.f32.mrf.mxu0
    %v757 = vadd.f32 0.0, %v756
    %758 = vmatmul.f32.gmra.mxu0 %v217
    %v759 = vpop.f32.mrf.mxu0
    %v760 = vadd.f32 0.0, %v759
    %761 = vdwg.mxu0
    %v762 = vadd.f32 %v714, %v757
    %v763 = vadd.f32 %v715, %v760
    %764 = vmatpush.msra.mxu0 0.0
    %765 = vmatpush.msra.mxu0 0.0
    %766 = vmatpush.msra.mxu0 0.0
    %767 = vmatpush.msra.mxu0 0.0
    %768 = vmatpush.msra.mxu0 0.0
    %769 = vmatpush.msra.mxu0 0.0
    %770 = vmatpush.msra.mxu0 0.0
    %771 = vmatpush.msra.mxu0 0.0
    %772 = vmatpush.msra.mxu0 0.0
    %773 = vmatpush.msra.mxu0 0.0
    %774 = vmatpush.msra.mxu0 0.0
    %775 = vmatpush.msra.mxu0 0.0
    %776 = vmatpush.msra.mxu0 %v57
    %777 = vmatpush.msra.mxu0 %v56
    %778 = vmatpush.msra.mxu0 %v55
    %779 = vmatpush.msra.mxu0 %v54
    %780 = vmatmul.f32.gmra.mxu0 %v639
    %v781 = vpop.f32.mrf.mxu0
    %v782 = vadd.f32 0.0, %v781
    %783 = vmatmul.f32.gmra.mxu0 %v641
    %v784 = vpop.f32.mrf.mxu0
    %v785 = vadd.f32 0.0, %v784
    %786 = vdwg.mxu0
    %787 = vmatpush.msra.mxu0 0.0
    %788 = vmatpush.msra.mxu0 0.0
    %789 = vmatpush.msra.mxu0 0.0
    %790 = vmatpush.msra.mxu0 0.0
    %791 = vmatpush.msra.mxu0 0.0
    %792 = vmatpush.msra.mxu0 0.0
    %793 = vmatpush.msra.mxu0 0.0
    %794 = vmatpush.msra.mxu0 0.0
    %795 = vmatpush.msra.mxu0 0.0
    %796 = vmatpush.msra.mxu0 0.0
    %797 = vmatpush.msra.mxu0 0.0
    %798 = vmatpush.msra.mxu0 0.0
    %799 = vmatpush.msra.mxu0 0.0
    %800 = vmatpush.msra.mxu0 0.0
    %801 = vmatpush.msra.mxu0 %v785
    %802 = vmatpush.msra.mxu0 %v782
    %803 = vmatmul.f32.gmra.mxu0 %v271
    %v804 = vpop.f32.mrf.mxu0
    %v805 = vadd.f32 0.0, %v804
    %806 = vmatmul.f32.gmra.mxu0 %v273
    %v807 = vpop.f32.mrf.mxu0
    %v808 = vadd.f32 0.0, %v807
    %809 = vdwg.mxu0
    %v810 = vadd.f32 %v762, %v805
    %v811 = vadd.f32 %v763, %v808
    %v812 = vxor.u32 %v810, 2147483648
    %v813 = vxor.u32 %v811, 2147483648
    %v814 = vmul.f32 %v812, 1.442695
    %v815 = vpow.pop %v814
    %v816 = vmul.f32 %v813, 1.442695
    %v817 = vpow.pop %v816
    %v818 = vadd.f32 %v815, 1.0
    %v819 = vadd.f32 %v817, 1.0
    %v820 = vrcp.pop %v818
    %v821 = vmul.f32 %v818, %v820
    %v822 = vsub.f32 1.0, %v821
    %v823 = vmul.f32 %v820, %v822
    %v824 = vadd.f32 %v820, %v823
    %vm825 = vweird.f32 %v818
    %vm826 = vweird.f32 %v820
    %vm827 = vmor %vm825, %vm826
    %v828 = vsel %vm827, %v820, %v824
    %v829 = vand.u32 2147483647, %v818
    %vm830 = vcmp.eq.f32.partialorder %v829, 8.507059e+37
    %v831 = vand.u32 %v818, 2147483648
    %v832 = vor.u32 1.1754944e-38, %v831
    %v833 = vsel %vm830, %v832, %v828
    %v834 = vmul.f32 1.0, %v833
    %v835 = vrcp.pop %v819
    %v836 = vmul.f32 %v819, %v835
    %v837 = vsub.f32 1.0, %v836
    %v838 = vmul.f32 %v835, %v837
    %v839 = vadd.f32 %v835, %v838
    %vm840 = vweird.f32 %v819
    %vm841 = vweird.f32 %v835
    %vm842 = vmor %vm840, %vm841
    %v843 = vsel %vm842, %v835, %v839
    %v844 = vand.u32 2147483647, %v819
    %vm845 = vcmp.eq.f32.partialorder %v844, 8.507059e+37
    %v846 = vand.u32 %v819, 2147483648
    %v847 = vor.u32 1.1754944e-38, %v846
    %v848 = vsel %vm845, %v847, %v843
    %v849 = vmul.f32 1.0, %v848
    %852 = vrot.lane.b32.xlu0 %v810, 32
    %v853 = vpop.permute.xlu0 %852
    %854 = vrot.lane.b32.xlu0 %v811, 32
    %v855 = vpop.permute.xlu0 %854
    %v858 = vmul.f32 %v834, %v853
    %v859 = vmul.f32 %v849, %v855
    %862 = vrot.lane.b32.xlu0 %v858, 64
    %v863 = vpop.permute.xlu0 %862
    %864 = vrot.lane.b32.xlu0 %v859, 64
    %v865 = vpop.permute.xlu0 %864
    %v868 = vadd.f32 %v810, %v863
    %v869 = vadd.f32 %v811, %v865
    %v870 = vtanh.pop %v868
    %v871 = vtanh.pop %v869
    %v872 = vsub.f32 1.0, %v834
    %v873 = vsub.f32 1.0, %v849
    %876 = vrot.lane.b32.xlu0 %v870, 96
    %v877 = vpop.permute.xlu0 %876
    %878 = vrot.lane.b32.xlu0 %v871, 96
    %v879 = vpop.permute.xlu0 %878
    %v882 = vmul.f32 %v872, %v877
    %v883 = vmul.f32 %v873, %v879
    %v884 = vmul.f32 %v834, %v631
    %v885 = vmul.f32 %v849, %v632
    %v886 = vadd.f32 %v882, %v884
    %v887 = vadd.f32 %v883, %v885
    %890 = vrot.lane.b32.xlu0 %v886, 96
    %v891 = vpop.permute.xlu0 %890
    %892 = vrot.lane.b32.xlu0 %v887, 96
    %v893 = vpop.permute.xlu0 %892
    %v894 = vsel %vm105, %v891, 0
    %v896 = vsel %vm105, %v893, 0
    %898 = vmatpush.msra.mxu0 0.0
    %899 = vmatpush.msra.mxu0 0.0
    %900 = vmatpush.msra.mxu0 0.0
    %901 = vmatpush.msra.mxu0 0.0
    %902 = vmatpush.msra.mxu0 0.0
    %903 = vmatpush.msra.mxu0 0.0
    %904 = vmatpush.msra.mxu0 0.0
    %905 = vmatpush.msra.mxu0 0.0
    %906 = vmatpush.msra.mxu0 0.0
    %907 = vmatpush.msra.mxu0 0.0
    %908 = vmatpush.msra.mxu0 0.0
    %909 = vmatpush.msra.mxu0 0.0
    %910 = vmatpush.msra.mxu0 %v61
    %911 = vmatpush.msra.mxu0 %v60
    %912 = vmatpush.msra.mxu0 %v59
    %913 = vmatpush.msra.mxu0 %v58
    %914 = vmatmul.f32.gmra.mxu0 %v894
    %v915 = vpop.f32.mrf.mxu0
    %v916 = vadd.f32 0.0, %v915
    %917 = vmatmul.f32.gmra.mxu0 %v896
    %v918 = vpop.f32.mrf.mxu0
    %v919 = vadd.f32 0.0, %v918
    %920 = vdwg.mxu0
    %v921 = vadd.f32 %v96, %v916
    %v922 = vadd.f32 %v99, %v919
    %923 = vmatpush.msra.mxu0 0.0
    %924 = vmatpush.msra.mxu0 0.0
    %925 = vmatpush.msra.mxu0 0.0
    %926 = vmatpush.msra.mxu0 0.0
    %927 = vmatpush.msra.mxu0 0.0
    %928 = vmatpush.msra.mxu0 0.0
    %929 = vmatpush.msra.mxu0 0.0
    %930 = vmatpush.msra.mxu0 0.0
    %931 = vmatpush.msra.mxu0 0.0
    %932 = vmatpush.msra.mxu0 0.0
    %933 = vmatpush.msra.mxu0 0.0
    %934 = vmatpush.msra.mxu0 0.0
    %935 = vmatpush.msra.mxu0 %v49
    %936 = vmatpush.msra.mxu0 %v48
    %937 = vmatpush.msra.mxu0 %v47
    %938 = vmatpush.msra.mxu0 %v46
    %939 = vmatmul.f32.gmra.mxu0 %v894
    %v940 = vpop.f32.mrf.mxu0
    %v941 = vadd.f32 0.0, %v940
    %942 = vmatmul.f32.gmra.mxu0 %v896
    %v943 = vpop.f32.mrf.mxu0
    %v944 = vadd.f32 0.0, %v943
    %945 = vdwg.mxu0
    %946 = vmatpush.msra.mxu0 0.0
    %947 = vmatpush.msra.mxu0 0.0
    %948 = vmatpush.msra.mxu0 0.0
    %949 = vmatpush.msra.mxu0 0.0
    %950 = vmatpush.msra.mxu0 0.0
    %951 = vmatpush.msra.mxu0 0.0
    %952 = vmatpush.msra.mxu0 0.0
    %953 = vmatpush.msra.mxu0 0.0
    %954 = vmatpush.msra.mxu0 0.0
    %955 = vmatpush.msra.mxu0 0.0
    %956 = vmatpush.msra.mxu0 0.0
    %957 = vmatpush.msra.mxu0 0.0
    %958 = vmatpush.msra.mxu0 0.0
    %959 = vmatpush.msra.mxu0 0.0
    %960 = vmatpush.msra.mxu0 %v944
    %961 = vmatpush.msra.mxu0 %v941
    %962 = vmatmul.f32.gmra.mxu0 %v159
    %v963 = vpop.f32.mrf.mxu0
    %v964 = vadd.f32 0.0, %v963
    %965 = vmatmul.f32.gmra.mxu0 %v161
    %v966 = vpop.f32.mrf.mxu0
    %v967 = vadd.f32 0.0, %v966
    %968 = vdwg.mxu0
    %v969 = vadd.f32 %v921, %v964
    %v970 = vadd.f32 %v922, %v967
    %971 = vmatpush.msra.mxu0 0.0
    %972 = vmatpush.msra.mxu0 0.0
    %973 = vmatpush.msra.mxu0 0.0
    %974 = vmatpush.msra.mxu0 0.0
    %975 = vmatpush.msra.mxu0 0.0
    %976 = vmatpush.msra.mxu0 0.0
    %977 = vmatpush.msra.mxu0 0.0
    %978 = vmatpush.msra.mxu0 0.0
    %979 = vmatpush.msra.mxu0 0.0
    %980 = vmatpush.msra.mxu0 0.0
    %981 = vmatpush.msra.mxu0 0.0
    %982 = vmatpush.msra.mxu0 0.0
    %983 = vmatpush.msra.mxu0 %v53
    %984 = vmatpush.msra.mxu0 %v52
    %985 = vmatpush.msra.mxu0 %v51
    %986 = vmatpush.msra.mxu0 %v50
    %987 = vmatmul.f32.gmra.mxu0 %v894
    %v988 = vpop.f32.mrf.mxu0
    %v989 = vadd.f32 0.0, %v988
    %990 = vmatmul.f32.gmra.mxu0 %v896
    %v991 = vpop.f32.mrf.mxu0
    %v992 = vadd.f32 0.0, %v991
    %993 = vdwg.mxu0
    %994 = vmatpush.msra.mxu0 0.0
    %995 = vmatpush.msra.mxu0 0.0
    %996 = vmatpush.msra.mxu0 0.0
    %997 = vmatpush.msra.mxu0 0.0
    %998 = vmatpush.msra.mxu0 0.0
    %999 = vmatpush.msra.mxu0 0.0
    %1000 = vmatpush.msra.mxu0 0.0
    %1001 = vmatpush.msra.mxu0 0.0
    %1002 = vmatpush.msra.mxu0 0.0
    %1003 = vmatpush.msra.mxu0 0.0
    %1004 = vmatpush.msra.mxu0 0.0
    %1005 = vmatpush.msra.mxu0 0.0
    %1006 = vmatpush.msra.mxu0 0.0
    %1007 = vmatpush.msra.mxu0 0.0
    %1008 = vmatpush.msra.mxu0 %v992
    %1009 = vmatpush.msra.mxu0 %v989
    %1010 = vmatmul.f32.gmra.mxu0 %v215
    %v1011 = vpop.f32.mrf.mxu0
    %v1012 = vadd.f32 0.0, %v1011
    %1013 = vmatmul.f32.gmra.mxu0 %v217
    %v1014 = vpop.f32.mrf.mxu0
    %v1015 = vadd.f32 0.0, %v1014
    %1016 = vdwg.mxu0
    %v1017 = vadd.f32 %v969, %v1012
    %v1018 = vadd.f32 %v970, %v1015
    %1019 = vmatpush.msra.mxu0 0.0
    %1020 = vmatpush.msra.mxu0 0.0
    %1021 = vmatpush.msra.mxu0 0.0
    %1022 = vmatpush.msra.mxu0 0.0
    %1023 = vmatpush.msra.mxu0 0.0
    %1024 = vmatpush.msra.mxu0 0.0
    %1025 = vmatpush.msra.mxu0 0.0
    %1026 = vmatpush.msra.mxu0 0.0
    %1027 = vmatpush.msra.mxu0 0.0
    %1028 = vmatpush.msra.mxu0 0.0
    %1029 = vmatpush.msra.mxu0 0.0
    %1030 = vmatpush.msra.mxu0 0.0
    %1031 = vmatpush.msra.mxu0 %v57
    %1032 = vmatpush.msra.mxu0 %v56
    %1033 = vmatpush.msra.mxu0 %v55
    %1034 = vmatpush.msra.mxu0 %v54
    %1035 = vmatmul.f32.gmra.mxu0 %v894
    %v1036 = vpop.f32.mrf.mxu0
    %v1037 = vadd.f32 0.0, %v1036
    %1038 = vmatmul.f32.gmra.mxu0 %v896
    %v1039 = vpop.f32.mrf.mxu0
    %v1040 = vadd.f32 0.0, %v1039
    %1041 = vdwg.mxu0
    %1042 = vmatpush.msra.mxu0 0.0
    %1043 = vmatpush.msra.mxu0 0.0
    %1044 = vmatpush.msra.mxu0 0.0
    %1045 = vmatpush.msra.mxu0 0.0
    %1046 = vmatpush.msra.mxu0 0.0
    %1047 = vmatpush.msra.mxu0 0.0
    %1048 = vmatpush.msra.mxu0 0.0
    %1049 = vmatpush.msra.mxu0 0.0
    %1050 = vmatpush.msra.mxu0 0.0
    %1051 = vmatpush.msra.mxu0 0.0
    %1052 = vmatpush.msra.mxu0 0.0
    %1053 = vmatpush.msra.mxu0 0.0
    %1054 = vmatpush.msra.mxu0 0.0
    %1055 = vmatpush.msra.mxu0 0.0
    %1056 = vmatpush.msra.mxu0 %v1040
    %1057 = vmatpush.msra.mxu0 %v1037
    %1058 = vmatmul.f32.gmra.mxu0 %v271
    %v1059 = vpop.f32.mrf.mxu0
    %v1060 = vadd.f32 0.0, %v1059
    %1061 = vmatmul.f32.gmra.mxu0 %v273
    %v1062 = vpop.f32.mrf.mxu0
    %v1063 = vadd.f32 0.0, %v1062
    %1064 = vdwg.mxu0
    %v1065 = vadd.f32 %v1017, %v1060
    %v1066 = vadd.f32 %v1018, %v1063
    %v1067 = vxor.u32 %v1065, 2147483648
    %v1068 = vxor.u32 %v1066, 2147483648
    %v1069 = vmul.f32 %v1067, 1.442695
    %v1070 = vpow.pop %v1069
    %v1071 = vmul.f32 %v1068, 1.442695
    %v1072 = vpow.pop %v1071
    %v1073 = vadd.f32 %v1070, 1.0
    %v1074 = vadd.f32 %v1072, 1.0
    %v1075 = vrcp.pop %v1073
    %v1076 = vmul.f32 %v1073, %v1075
    %v1077 = vsub.f32 1.0, %v1076
    %v1078 = vmul.f32 %v1075, %v1077
    %v1079 = vadd.f32 %v1075, %v1078
    %vm1080 = vweird.f32 %v1073
    %vm1081 = vweird.f32 %v1075
    %vm1082 = vmor %vm1080, %vm1081
    %v1083 = vsel %vm1082, %v1075, %v1079
    %v1084 = vand.u32 2147483647, %v1073
    %vm1085 = vcmp.eq.f32.partialorder %v1084, 8.507059e+37
    %v1086 = vand.u32 %v1073, 2147483648
    %v1087 = vor.u32 1.1754944e-38, %v1086
    %v1088 = vsel %vm1085, %v1087, %v1083
    %v1089 = vmul.f32 1.0, %v1088
    %v1090 = vrcp.pop %v1074
    %v1091 = vmul.f32 %v1074, %v1090
    %v1092 = vsub.f32 1.0, %v1091
    %v1093 = vmul.f32 %v1090, %v1092
    %v1094 = vadd.f32 %v1090, %v1093
    %vm1095 = vweird.f32 %v1074
    %vm1096 = vweird.f32 %v1090
    %vm1097 = vmor %vm1095, %vm1096
    %v1098 = vsel %vm1097, %v1090, %v1094
    %v1099 = vand.u32 2147483647, %v1074
    %vm1100 = vcmp.eq.f32.partialorder %v1099, 8.507059e+37
    %v1101 = vand.u32 %v1074, 2147483648
    %v1102 = vor.u32 1.1754944e-38, %v1101
    %v1103 = vsel %vm1100, %v1102, %v1098
    %v1104 = vmul.f32 1.0, %v1103
    %1107 = vrot.lane.b32.xlu0 %v1065, 32
    %v1108 = vpop.permute.xlu0 %1107
    %1109 = vrot.lane.b32.xlu0 %v1066, 32
    %v1110 = vpop.permute.xlu0 %1109
    %v1113 = vmul.f32 %v1089, %v1108
    %v1114 = vmul.f32 %v1104, %v1110
    %1117 = vrot.lane.b32.xlu0 %v1113, 64
    %v1118 = vpop.permute.xlu0 %1117
    %1119 = vrot.lane.b32.xlu0 %v1114, 64
    %v1120 = vpop.permute.xlu0 %1119
    %v1123 = vadd.f32 %v1065, %v1118
    %v1124 = vadd.f32 %v1066, %v1120
    %v1125 = vtanh.pop %v1123
    %v1126 = vtanh.pop %v1124
    %v1127 = vsub.f32 1.0, %v1089
    %v1128 = vsub.f32 1.0, %v1104
    %1131 = vrot.lane.b32.xlu0 %v1125, 96
    %v1132 = vpop.permute.xlu0 %1131
    %1133 = vrot.lane.b32.xlu0 %v1126, 96
    %v1134 = vpop.permute.xlu0 %1133
    %v1137 = vmul.f32 %v1127, %v1132
    %v1138 = vmul.f32 %v1128, %v1134
    %v1139 = vmul.f32 %v1089, %v886
    %v1140 = vmul.f32 %v1104, %v887
    %v1141 = vadd.f32 %v1137, %v1139
    %v1142 = vadd.f32 %v1138, %v1140
    %1145 = vrot.lane.b32.xlu0 %v1141, 96
    %v1146 = vpop.permute.xlu0 %1145
    %1147 = vrot.lane.b32.xlu0 %v1142, 96
    %v1148 = vpop.permute.xlu0 %1147
    %v1149 = vsel %vm105, %v1146, 0
    %v1151 = vsel %vm105, %v1148, 0
    %1153 = vmatpush.msra.mxu0 0.0
    %1154 = vmatpush.msra.mxu0 0.0
    %1155 = vmatpush.msra.mxu0 0.0
    %1156 = vmatpush.msra.mxu0 0.0
    %1157 = vmatpush.msra.mxu0 0.0
    %1158 = vmatpush.msra.mxu0 0.0
    %1159 = vmatpush.msra.mxu0 0.0
    %1160 = vmatpush.msra.mxu0 0.0
    %1161 = vmatpush.msra.mxu0 0.0
    %1162 = vmatpush.msra.mxu0 0.0
    %1163 = vmatpush.msra.mxu0 0.0
    %1164 = vmatpush.msra.mxu0 0.0
    %1165 = vmatpush.msra.mxu0 %v61
    %1166 = vmatpush.msra.mxu0 %v60
    %1167 = vmatpush.msra.mxu0 %v59
    %1168 = vmatpush.msra.mxu0 %v58
    %1169 = vmatmul.f32.gmra.mxu0 %v1149
    %v1170 = vpop.f32.mrf.mxu0
    %v1171 = vadd.f32 0.0, %v1170
    %1172 = vmatmul.f32.gmra.mxu0 %v1151
    %v1173 = vpop.f32.mrf.mxu0
    %v1174 = vadd.f32 0.0, %v1173
    %1175 = vdwg.mxu0
    %v1176 = vadd.f32 %v96, %v1171
    %v1177 = vadd.f32 %v99, %v1174
    %1178 = vmatpush.msra.mxu0 0.0
    %1179 = vmatpush.msra.mxu0 0.0
    %1180 = vmatpush.msra.mxu0 0.0
    %1181 = vmatpush.msra.mxu0 0.0
    %1182 = vmatpush.msra.mxu0 0.0
    %1183 = vmatpush.msra.mxu0 0.0
    %1184 = vmatpush.msra.mxu0 0.0
    %1185 = vmatpush.msra.mxu0 0.0
    %1186 = vmatpush.msra.mxu0 0.0
    %1187 = vmatpush.msra.mxu0 0.0
    %1188 = vmatpush.msra.mxu0 0.0
    %1189 = vmatpush.msra.mxu0 0.0
    %1190 = vmatpush.msra.mxu0 %v49
    %1191 = vmatpush.msra.mxu0 %v48
    %1192 = vmatpush.msra.mxu0 %v47
    %1193 = vmatpush.msra.mxu0 %v46
    %1194 = vmatmul.f32.gmra.mxu0 %v1149
    %v1195 = vpop.f32.mrf.mxu0
    %v1196 = vadd.f32 0.0, %v1195
    %1197 = vmatmul.f32.gmra.mxu0 %v1151
    %v1198 = vpop.f32.mrf.mxu0
    %v1199 = vadd.f32 0.0, %v1198
    %1200 = vdwg.mxu0
    %1201 = vmatpush.msra.mxu0 0.0
    %1202 = vmatpush.msra.mxu0 0.0
    %1203 = vmatpush.msra.mxu0 0.0
    %1204 = vmatpush.msra.mxu0 0.0
    %1205 = vmatpush.msra.mxu0 0.0
    %1206 = vmatpush.msra.mxu0 0.0
    %1207 = vmatpush.msra.mxu0 0.0
    %1208 = vmatpush.msra.mxu0 0.0
    %1209 = vmatpush.msra.mxu0 0.0
    %1210 = vmatpush.msra.mxu0 0.0
    %1211 = vmatpush.msra.mxu0 0.0
    %1212 = vmatpush.msra.mxu0 0.0
    %1213 = vmatpush.msra.mxu0 0.0
    %1214 = vmatpush.msra.mxu0 0.0
    %1215 = vmatpush.msra.mxu0 %v1199
    %1216 = vmatpush.msra.mxu0 %v1196
    %1217 = vmatmul.f32.gmra.mxu0 %v159
    %v1218 = vpop.f32.mrf.mxu0
    %v1219 = vadd.f32 0.0, %v1218
    %1220 = vmatmul.f32.gmra.mxu0 %v161
    %v1221 = vpop.f32.mrf.mxu0
    %v1222 = vadd.f32 0.0, %v1221
    %1223 = vdwg.mxu0
    %v1224 = vadd.f32 %v1176, %v1219
    %v1225 = vadd.f32 %v1177, %v1222
    %1226 = vmatpush.msra.mxu0 0.0
    %1227 = vmatpush.msra.mxu0 0.0
    %1228 = vmatpush.msra.mxu0 0.0
    %1229 = vmatpush.msra.mxu0 0.0
    %1230 = vmatpush.msra.mxu0 0.0
    %1231 = vmatpush.msra.mxu0 0.0
    %1232 = vmatpush.msra.mxu0 0.0
    %1233 = vmatpush.msra.mxu0 0.0
    %1234 = vmatpush.msra.mxu0 0.0
    %1235 = vmatpush.msra.mxu0 0.0
    %1236 = vmatpush.msra.mxu0 0.0
    %1237 = vmatpush.msra.mxu0 0.0
    %1238 = vmatpush.msra.mxu0 %v53
    %1239 = vmatpush.msra.mxu0 %v52
    %1240 = vmatpush.msra.mxu0 %v51
    %1241 = vmatpush.msra.mxu0 %v50
    %1242 = vmatmul.f32.gmra.mxu0 %v1149
    %v1243 = vpop.f32.mrf.mxu0
    %v1244 = vadd.f32 0.0, %v1243
    %1245 = vmatmul.f32.gmra.mxu0 %v1151
    %v1246 = vpop.f32.mrf.mxu0
    %v1247 = vadd.f32 0.0, %v1246
    %1248 = vdwg.mxu0
    %1249 = vmatpush.msra.mxu0 0.0
    %1250 = vmatpush.msra.mxu0 0.0
    %1251 = vmatpush.msra.mxu0 0.0
    %1252 = vmatpush.msra.mxu0 0.0
    %1253 = vmatpush.msra.mxu0 0.0
    %1254 = vmatpush.msra.mxu0 0.0
    %1255 = vmatpush.msra.mxu0 0.0
    %1256 = vmatpush.msra.mxu0 0.0
    %1257 = vmatpush.msra.mxu0 0.0
    %1258 = vmatpush.msra.mxu0 0.0
    %1259 = vmatpush.msra.mxu0 0.0
    %1260 = vmatpush.msra.mxu0 0.0
    %1261 = vmatpush.msra.mxu0 0.0
    %1262 = vmatpush.msra.mxu0 0.0
    %1263 = vmatpush.msra.mxu0 %v1247
    %1264 = vmatpush.msra.mxu0 %v1244
    %1265 = vmatmul.f32.gmra.mxu0 %v215
    %v1266 = vpop.f32.mrf.mxu0
    %v1267 = vadd.f32 0.0, %v1266
    %1268 = vmatmul.f32.gmra.mxu0 %v217
    %v1269 = vpop.f32.mrf.mxu0
    %v1270 = vadd.f32 0.0, %v1269
    %1271 = vdwg.mxu0
    %v1272 = vadd.f32 %v1224, %v1267
    %v1273 = vadd.f32 %v1225, %v1270
    %1274 = vmatpush.msra.mxu0 0.0
    %1275 = vmatpush.msra.mxu0 0.0
    %1276 = vmatpush.msra.mxu0 0.0
    %1277 = vmatpush.msra.mxu0 0.0
    %1278 = vmatpush.msra.mxu0 0.0
    %1279 = vmatpush.msra.mxu0 0.0
    %1280 = vmatpush.msra.mxu0 0.0
    %1281 = vmatpush.msra.mxu0 0.0
    %1282 = vmatpush.msra.mxu0 0.0
    %1283 = vmatpush.msra.mxu0 0.0
    %1284 = vmatpush.msra.mxu0 0.0
    %1285 = vmatpush.msra.mxu0 0.0
    %1286 = vmatpush.msra.mxu0 %v57
    %1287 = vmatpush.msra.mxu0 %v56
    %1288 = vmatpush.msra.mxu0 %v55
    %1289 = vmatpush.msra.mxu0 %v54
    %1290 = vmatmul.f32.gmra.mxu0 %v1149
    %v1291 = vpop.f32.mrf.mxu0
    %v1292 = vadd.f32 0.0, %v1291
    %1293 = vmatmul.f32.gmra.mxu0 %v1151
    %v1294 = vpop.f32.mrf.mxu0
    %v1295 = vadd.f32 0.0, %v1294
    %1296 = vdwg.mxu0
    %1297 = vmatpush.msra.mxu0 0.0
    %1298 = vmatpush.msra.mxu0 0.0
    %1299 = vmatpush.msra.mxu0 0.0
    %1300 = vmatpush.msra.mxu0 0.0
    %1301 = vmatpush.msra.mxu0 0.0
    %1302 = vmatpush.msra.mxu0 0.0
    %1303 = vmatpush.msra.mxu0 0.0
    %1304 = vmatpush.msra.mxu0 0.0
    %1305 = vmatpush.msra.mxu0 0.0
    %1306 = vmatpush.msra.mxu0 0.0
    %1307 = vmatpush.msra.mxu0 0.0
    %1308 = vmatpush.msra.mxu0 0.0
    %1309 = vmatpush.msra.mxu0 0.0
    %1310 = vmatpush.msra.mxu0 0.0
    %1311 = vmatpush.msra.mxu0 %v1295
    %1312 = vmatpush.msra.mxu0 %v1292
    %1313 = vmatmul.f32.gmra.mxu0 %v271
    %v1314 = vpop.f32.mrf.mxu0
    %v1315 = vadd.f32 0.0, %v1314
    %1316 = vmatmul.f32.gmra.mxu0 %v273
    %v1317 = vpop.f32.mrf.mxu0
    %v1318 = vadd.f32 0.0, %v1317
    %1319 = vdwg.mxu0
    %v1320 = vadd.f32 %v1272, %v1315
    %v1321 = vadd.f32 %v1273, %v1318
    %v1322 = vxor.u32 %v1320, 2147483648
    %v1323 = vxor.u32 %v1321, 2147483648
    %v1324 = vmul.f32 %v1322, 1.442695
    %v1325 = vpow.pop %v1324
    %v1326 = vmul.f32 %v1323, 1.442695
    %v1327 = vpow.pop %v1326
    %v1328 = vadd.f32 %v1325, 1.0
    %v1329 = vadd.f32 %v1327, 1.0
    %v1330 = vrcp.pop %v1328
    %v1331 = vmul.f32 %v1328, %v1330
    %v1332 = vsub.f32 1.0, %v1331
    %v1333 = vmul.f32 %v1330, %v1332
    %v1334 = vadd.f32 %v1330, %v1333
    %vm1335 = vweird.f32 %v1328
    %vm1336 = vweird.f32 %v1330
    %vm1337 = vmor %vm1335, %vm1336
    %v1338 = vsel %vm1337, %v1330, %v1334
    %v1339 = vand.u32 2147483647, %v1328
    %vm1340 = vcmp.eq.f32.partialorder %v1339, 8.507059e+37
    %v1341 = vand.u32 %v1328, 2147483648
    %v1342 = vor.u32 1.1754944e-38, %v1341
    %v1343 = vsel %vm1340, %v1342, %v1338
    %v1344 = vmul.f32 1.0, %v1343
    %v1345 = vrcp.pop %v1329
    %v1346 = vmul.f32 %v1329, %v1345
    %v1347 = vsub.f32 1.0, %v1346
    %v1348 = vmul.f32 %v1345, %v1347
    %v1349 = vadd.f32 %v1345, %v1348
    %vm1350 = vweird.f32 %v1329
    %vm1351 = vweird.f32 %v1345
    %vm1352 = vmor %vm1350, %vm1351
    %v1353 = vsel %vm1352, %v1345, %v1349
    %v1354 = vand.u32 2147483647, %v1329
    %vm1355 = vcmp.eq.f32.partialorder %v1354, 8.507059e+37
    %v1356 = vand.u32 %v1329, 2147483648
    %v1357 = vor.u32 1.1754944e-38, %v1356
    %v1358 = vsel %vm1355, %v1357, %v1353
    %v1359 = vmul.f32 1.0, %v1358
    %1362 = vrot.lane.b32.xlu0 %v1320, 32
    %v1363 = vpop.permute.xlu0 %1362
    %1364 = vrot.lane.b32.xlu0 %v1321, 32
    %v1365 = vpop.permute.xlu0 %1364
    %v1368 = vmul.f32 %v1344, %v1363
    %v1369 = vmul.f32 %v1359, %v1365
    %1372 = vrot.lane.b32.xlu0 %v1368, 64
    %v1373 = vpop.permute.xlu0 %1372
    %1374 = vrot.lane.b32.xlu0 %v1369, 64
    %v1375 = vpop.permute.xlu0 %1374
    %v1378 = vadd.f32 %v1320, %v1373
    %v1379 = vadd.f32 %v1321, %v1375
    %v1380 = vtanh.pop %v1378
    %v1381 = vtanh.pop %v1379
    %v1382 = vsub.f32 1.0, %v1344
    %v1383 = vsub.f32 1.0, %v1359
    %1386 = vrot.lane.b32.xlu0 %v1380, 96
    %v1387 = vpop.permute.xlu0 %1386
    %1388 = vrot.lane.b32.xlu0 %v1381, 96
    %v1389 = vpop.permute.xlu0 %1388
    %v1392 = vmul.f32 %v1382, %v1387
    %v1393 = vmul.f32 %v1383, %v1389
    %v1394 = vmul.f32 %v1344, %v1141
    %v1395 = vmul.f32 %v1359, %v1142
    %v1396 = vadd.f32 %v1392, %v1394
    %v1397 = vadd.f32 %v1393, %v1395
    %1400 = vrot.lane.b32.xlu0 %v1396, 96
    %v1401 = vpop.permute.xlu0 %1400
    %1402 = vrot.lane.b32.xlu0 %v1397, 96
    %v1403 = vpop.permute.xlu0 %1402
    %v1404 = vsel %vm105, %v1401, 0
    %v1406 = vsel %vm105, %v1403, 0
    %1408 = vmatpush.msra.mxu0 0.0
    %1409 = vmatpush.msra.mxu0 0.0
    %1410 = vmatpush.msra.mxu0 0.0
    %1411 = vmatpush.msra.mxu0 0.0
    %1412 = vmatpush.msra.mxu0 0.0
    %1413 = vmatpush.msra.mxu0 0.0
    %1414 = vmatpush.msra.mxu0 0.0
    %1415 = vmatpush.msra.mxu0 0.0
    %1416 = vmatpush.msra.mxu0 0.0
    %1417 = vmatpush.msra.mxu0 0.0
    %1418 = vmatpush.msra.mxu0 0.0
    %1419 = vmatpush.msra.mxu0 0.0
    %1420 = vmatpush.msra.mxu0 %v61
    %1421 = vmatpush.msra.mxu0 %v60
    %1422 = vmatpush.msra.mxu0 %v59
    %1423 = vmatpush.msra.mxu0 %v58
    %1424 = vmatmul.f32.gmra.mxu0 %v1404
    %v1425 = vpop.f32.mrf.mxu0
    %v1426 = vadd.f32 0.0, %v1425
    %1427 = vmatmul.f32.gmra.mxu0 %v1406
    %v1428 = vpop.f32.mrf.mxu0
    %v1429 = vadd.f32 0.0, %v1428
    %1430 = vdwg.mxu0
    %v1431 = vadd.f32 %v96, %v1426
    %v1432 = vadd.f32 %v99, %v1429
    %1433 = vmatpush.msra.mxu0 0.0
    %1434 = vmatpush.msra.mxu0 0.0
    %1435 = vmatpush.msra.mxu0 0.0
    %1436 = vmatpush.msra.mxu0 0.0
    %1437 = vmatpush.msra.mxu0 0.0
    %1438 = vmatpush.msra.mxu0 0.0
    %1439 = vmatpush.msra.mxu0 0.0
    %1440 = vmatpush.msra.mxu0 0.0
    %1441 = vmatpush.msra.mxu0 0.0
    %1442 = vmatpush.msra.mxu0 0.0
    %1443 = vmatpush.msra.mxu0 0.0
    %1444 = vmatpush.msra.mxu0 0.0
    %1445 = vmatpush.msra.mxu0 %v49
    %1446 = vmatpush.msra.mxu0 %v48
    %1447 = vmatpush.msra.mxu0 %v47
    %1448 = vmatpush.msra.mxu0 %v46
    %1449 = vmatmul.f32.gmra.mxu0 %v1404
    %v1450 = vpop.f32.mrf.mxu0
    %v1451 = vadd.f32 0.0, %v1450
    %1452 = vmatmul.f32.gmra.mxu0 %v1406
    %v1453 = vpop.f32.mrf.mxu0
    %v1454 = vadd.f32 0.0, %v1453
    %1455 = vdwg.mxu0
    %1456 = vmatpush.msra.mxu0 0.0
    %1457 = vmatpush.msra.mxu0 0.0
    %1458 = vmatpush.msra.mxu0 0.0
    %1459 = vmatpush.msra.mxu0 0.0
    %1460 = vmatpush.msra.mxu0 0.0
    %1461 = vmatpush.msra.mxu0 0.0
    %1462 = vmatpush.msra.mxu0 0.0
    %1463 = vmatpush.msra.mxu0 0.0
    %1464 = vmatpush.msra.mxu0 0.0
    %1465 = vmatpush.msra.mxu0 0.0
    %1466 = vmatpush.msra.mxu0 0.0
    %1467 = vmatpush.msra.mxu0 0.0
    %1468 = vmatpush.msra.mxu0 0.0
    %1469 = vmatpush.msra.mxu0 0.0
    %1470 = vmatpush.msra.mxu0 %v1454
    %1471 = vmatpush.msra.mxu0 %v1451
    %1472 = vmatmul.f32.gmra.mxu0 %v159
    %v1473 = vpop.f32.mrf.mxu0
    %v1474 = vadd.f32 0.0, %v1473
    %1475 = vmatmul.f32.gmra.mxu0 %v161
    %v1476 = vpop.f32.mrf.mxu0
    %v1477 = vadd.f32 0.0, %v1476
    %1478 = vdwg.mxu0
    %v1479 = vadd.f32 %v1431, %v1474
    %v1480 = vadd.f32 %v1432, %v1477
    %1481 = vmatpush.msra.mxu0 0.0
    %1482 = vmatpush.msra.mxu0 0.0
    %1483 = vmatpush.msra.mxu0 0.0
    %1484 = vmatpush.msra.mxu0 0.0
    %1485 = vmatpush.msra.mxu0 0.0
    %1486 = vmatpush.msra.mxu0 0.0
    %1487 = vmatpush.msra.mxu0 0.0
    %1488 = vmatpush.msra.mxu0 0.0
    %1489 = vmatpush.msra.mxu0 0.0
    %1490 = vmatpush.msra.mxu0 0.0
    %1491 = vmatpush.msra.mxu0 0.0
    %1492 = vmatpush.msra.mxu0 0.0
    %1493 = vmatpush.msra.mxu0 %v53
    %1494 = vmatpush.msra.mxu0 %v52
    %1495 = vmatpush.msra.mxu0 %v51
    %1496 = vmatpush.msra.mxu0 %v50
    %1497 = vmatmul.f32.gmra.mxu0 %v1404
    %v1498 = vpop.f32.mrf.mxu0
    %v1499 = vadd.f32 0.0, %v1498
    %1500 = vmatmul.f32.gmra.mxu0 %v1406
    %v1501 = vpop.f32.mrf.mxu0
    %v1502 = vadd.f32 0.0, %v1501
    %1503 = vdwg.mxu0
    %1504 = vmatpush.msra.mxu0 0.0
    %1505 = vmatpush.msra.mxu0 0.0
    %1506 = vmatpush.msra.mxu0 0.0
    %1507 = vmatpush.msra.mxu0 0.0
    %1508 = vmatpush.msra.mxu0 0.0
    %1509 = vmatpush.msra.mxu0 0.0
    %1510 = vmatpush.msra.mxu0 0.0
    %1511 = vmatpush.msra.mxu0 0.0
    %1512 = vmatpush.msra.mxu0 0.0
    %1513 = vmatpush.msra.mxu0 0.0
    %1514 = vmatpush.msra.mxu0 0.0
    %1515 = vmatpush.msra.mxu0 0.0
    %1516 = vmatpush.msra.mxu0 0.0
    %1517 = vmatpush.msra.mxu0 0.0
    %1518 = vmatpush.msra.mxu0 %v1502
    %1519 = vmatpush.msra.mxu0 %v1499
    %1520 = vmatmul.f32.gmra.mxu0 %v215
    %v1521 = vpop.f32.mrf.mxu0
    %v1522 = vadd.f32 0.0, %v1521
    %1523 = vmatmul.f32.gmra.mxu0 %v217
    %v1524 = vpop.f32.mrf.mxu0
    %v1525 = vadd.f32 0.0, %v1524
    %1526 = vdwg.mxu0
    %v1527 = vadd.f32 %v1479, %v1522
    %v1528 = vadd.f32 %v1480, %v1525
    %1529 = vmatpush.msra.mxu0 0.0
    %1530 = vmatpush.msra.mxu0 0.0
    %1531 = vmatpush.msra.mxu0 0.0
    %1532 = vmatpush.msra.mxu0 0.0
    %1533 = vmatpush.msra.mxu0 0.0
    %1534 = vmatpush.msra.mxu0 0.0
    %1535 = vmatpush.msra.mxu0 0.0
    %1536 = vmatpush.msra.mxu0 0.0
    %1537 = vmatpush.msra.mxu0 0.0
    %1538 = vmatpush.msra.mxu0 0.0
    %1539 = vmatpush.msra.mxu0 0.0
    %1540 = vmatpush.msra.mxu0 0.0
    %1541 = vmatpush.msra.mxu0 %v57
    %1542 = vmatpush.msra.mxu0 %v56
    %1543 = vmatpush.msra.mxu0 %v55
    %1544 = vmatpush.msra.mxu0 %v54
    %1545 = vmatmul.f32.gmra.mxu0 %v1404
    %v1546 = vpop.f32.mrf.mxu0
    %v1547 = vadd.f32 0.0, %v1546
    %1548 = vmatmul.f32.gmra.mxu0 %v1406
    %v1549 = vpop.f32.mrf.mxu0
    %v1550 = vadd.f32 0.0, %v1549
    %1551 = vdwg.mxu0
    %1552 = vmatpush.msra.mxu0 0.0
    %1553 = vmatpush.msra.mxu0 0.0
    %1554 = vmatpush.msra.mxu0 0.0
    %1555 = vmatpush.msra.mxu0 0.0
    %1556 = vmatpush.msra.mxu0 0.0
    %1557 = vmatpush.msra.mxu0 0.0
    %1558 = vmatpush.msra.mxu0 0.0
    %1559 = vmatpush.msra.mxu0 0.0
    %1560 = vmatpush.msra.mxu0 0.0
    %1561 = vmatpush.msra.mxu0 0.0
    %1562 = vmatpush.msra.mxu0 0.0
    %1563 = vmatpush.msra.mxu0 0.0
    %1564 = vmatpush.msra.mxu0 0.0
    %1565 = vmatpush.msra.mxu0 0.0
    %1566 = vmatpush.msra.mxu0 %v1550
    %1567 = vmatpush.msra.mxu0 %v1547
    %1568 = vmatmul.f32.gmra.mxu0 %v271
    %v1569 = vpop.f32.mrf.mxu0
    %v1570 = vadd.f32 0.0, %v1569
    %1571 = vmatmul.f32.gmra.mxu0 %v273
    %v1572 = vpop.f32.mrf.mxu0
    %v1573 = vadd.f32 0.0, %v1572
    %1574 = vdwg.mxu0
    %v1575 = vadd.f32 %v1527, %v1570
    %v1576 = vadd.f32 %v1528, %v1573
    %v1577 = vxor.u32 %v1575, 2147483648
    %v1578 = vxor.u32 %v1576, 2147483648
    %v1579 = vmul.f32 %v1577, 1.442695
    %v1580 = vpow.pop %v1579
    %v1581 = vmul.f32 %v1578, 1.442695
    %v1582 = vpow.pop %v1581
    %v1583 = vadd.f32 %v1580, 1.0
    %v1584 = vadd.f32 %v1582, 1.0
    %v1585 = vrcp.pop %v1583
    %v1586 = vmul.f32 %v1583, %v1585
    %v1587 = vsub.f32 1.0, %v1586
    %v1588 = vmul.f32 %v1585, %v1587
    %v1589 = vadd.f32 %v1585, %v1588
    %vm1590 = vweird.f32 %v1583
    %vm1591 = vweird.f32 %v1585
    %vm1592 = vmor %vm1590, %vm1591
    %v1593 = vsel %vm1592, %v1585, %v1589
    %v1594 = vand.u32 2147483647, %v1583
    %vm1595 = vcmp.eq.f32.partialorder %v1594, 8.507059e+37
    %v1596 = vand.u32 %v1583, 2147483648
    %v1597 = vor.u32 1.1754944e-38, %v1596
    %v1598 = vsel %vm1595, %v1597, %v1593
    %v1599 = vmul.f32 1.0, %v1598
    %v1600 = vrcp.pop %v1584
    %v1601 = vmul.f32 %v1584, %v1600
    %v1602 = vsub.f32 1.0, %v1601
    %v1603 = vmul.f32 %v1600, %v1602
    %v1604 = vadd.f32 %v1600, %v1603
    %vm1605 = vweird.f32 %v1584
    %vm1606 = vweird.f32 %v1600
    %vm1607 = vmor %vm1605, %vm1606
    %v1608 = vsel %vm1607, %v1600, %v1604
    %v1609 = vand.u32 2147483647, %v1584
    %vm1610 = vcmp.eq.f32.partialorder %v1609, 8.507059e+37
    %v1611 = vand.u32 %v1584, 2147483648
    %v1612 = vor.u32 1.1754944e-38, %v1611
    %v1613 = vsel %vm1610, %v1612, %v1608
    %v1614 = vmul.f32 1.0, %v1613
    %1617 = vrot.lane.b32.xlu0 %v1575, 32
    %v1618 = vpop.permute.xlu0 %1617
    %1619 = vrot.lane.b32.xlu0 %v1576, 32
    %v1620 = vpop.permute.xlu0 %1619
    %v1623 = vmul.f32 %v1599, %v1618
    %v1624 = vmul.f32 %v1614, %v1620
    %1627 = vrot.lane.b32.xlu0 %v1623, 64
    %v1628 = vpop.permute.xlu0 %1627
    %1629 = vrot.lane.b32.xlu0 %v1624, 64
    %v1630 = vpop.permute.xlu0 %1629
    %v1633 = vadd.f32 %v1575, %v1628
    %v1634 = vadd.f32 %v1576, %v1630
    %v1635 = vtanh.pop %v1633
    %v1636 = vtanh.pop %v1634
    %v1637 = vsub.f32 1.0, %v1599
    %v1638 = vsub.f32 1.0, %v1614
    %1641 = vrot.lane.b32.xlu0 %v1635, 96
    %v1642 = vpop.permute.xlu0 %1641
    %1643 = vrot.lane.b32.xlu0 %v1636, 96
    %v1644 = vpop.permute.xlu0 %1643
    %v1647 = vmul.f32 %v1637, %v1642
    %v1648 = vmul.f32 %v1638, %v1644
    %v1649 = vmul.f32 %v1599, %v1396
    %v1650 = vmul.f32 %v1614, %v1397
    %v1651 = vadd.f32 %v1647, %v1649
    %v1652 = vadd.f32 %v1648, %v1650
    %1655 = vrot.lane.b32.xlu0 %v1651, 96
    %v1656 = vpop.permute.xlu0 %1655
    %1657 = vrot.lane.b32.xlu0 %v1652, 96
    %v1658 = vpop.permute.xlu0 %1657
    %v1659 = vsel %vm105, %v1656, 0
    %v1661 = vsel %vm105, %v1658, 0
    %1663 = vmatpush.msra.mxu0 0.0
    %1664 = vmatpush.msra.mxu0 0.0
    %1665 = vmatpush.msra.mxu0 0.0
    %1666 = vmatpush.msra.mxu0 0.0
    %1667 = vmatpush.msra.mxu0 0.0
    %1668 = vmatpush.msra.mxu0 0.0
    %1669 = vmatpush.msra.mxu0 0.0
    %1670 = vmatpush.msra.mxu0 0.0
    %1671 = vmatpush.msra.mxu0 0.0
    %1672 = vmatpush.msra.mxu0 0.0
    %1673 = vmatpush.msra.mxu0 0.0
    %1674 = vmatpush.msra.mxu0 0.0
    %1675 = vmatpush.msra.mxu0 %v61
    %1676 = vmatpush.msra.mxu0 %v60
    %1677 = vmatpush.msra.mxu0 %v59
    %1678 = vmatpush.msra.mxu0 %v58
    %1679 = vmatmul.f32.gmra.mxu0 %v1659
    %v1680 = vpop.f32.mrf.mxu0
    %v1681 = vadd.f32 0.0, %v1680
    %1682 = vmatmul.f32.gmra.mxu0 %v1661
    %v1683 = vpop.f32.mrf.mxu0
    %v1684 = vadd.f32 0.0, %v1683
    %1685 = vdwg.mxu0
    %v1686 = vadd.f32 %v96, %v1681
    %v1687 = vadd.f32 %v99, %v1684
    %1688 = vmatpush.msra.mxu0 0.0
    %1689 = vmatpush.msra.mxu0 0.0
    %1690 = vmatpush.msra.mxu0 0.0
    %1691 = vmatpush.msra.mxu0 0.0
    %1692 = vmatpush.msra.mxu0 0.0
    %1693 = vmatpush.msra.mxu0 0.0
    %1694 = vmatpush.msra.mxu0 0.0
    %1695 = vmatpush.msra.mxu0 0.0
    %1696 = vmatpush.msra.mxu0 0.0
    %1697 = vmatpush.msra.mxu0 0.0
    %1698 = vmatpush.msra.mxu0 0.0
    %1699 = vmatpush.msra.mxu0 0.0
    %1700 = vmatpush.msra.mxu0 %v49
    %1701 = vmatpush.msra.mxu0 %v48
    %1702 = vmatpush.msra.mxu0 %v47
    %1703 = vmatpush.msra.mxu0 %v46
    %1704 = vmatmul.f32.gmra.mxu0 %v1659
    %v1705 = vpop.f32.mrf.mxu0
    %v1706 = vadd.f32 0.0, %v1705
    %1707 = vmatmul.f32.gmra.mxu0 %v1661
    %v1708 = vpop.f32.mrf.mxu0
    %v1709 = vadd.f32 0.0, %v1708
    %1710 = vdwg.mxu0
    %1711 = vmatpush.msra.mxu0 0.0
    %1712 = vmatpush.msra.mxu0 0.0
    %1713 = vmatpush.msra.mxu0 0.0
    %1714 = vmatpush.msra.mxu0 0.0
    %1715 = vmatpush.msra.mxu0 0.0
    %1716 = vmatpush.msra.mxu0 0.0
    %1717 = vmatpush.msra.mxu0 0.0
    %1718 = vmatpush.msra.mxu0 0.0
    %1719 = vmatpush.msra.mxu0 0.0
    %1720 = vmatpush.msra.mxu0 0.0
    %1721 = vmatpush.msra.mxu0 0.0
    %1722 = vmatpush.msra.mxu0 0.0
    %1723 = vmatpush.msra.mxu0 0.0
    %1724 = vmatpush.msra.mxu0 0.0
    %1725 = vmatpush.msra.mxu0 %v1709
    %1726 = vmatpush.msra.mxu0 %v1706
    %1727 = vmatmul.f32.gmra.mxu0 %v159
    %v1728 = vpop.f32.mrf.mxu0
    %v1729 = vadd.f32 0.0, %v1728
    %1730 = vmatmul.f32.gmra.mxu0 %v161
    %v1731 = vpop.f32.mrf.mxu0
    %v1732 = vadd.f32 0.0, %v1731
    %1733 = vdwg.mxu0
    %v1734 = vadd.f32 %v1686, %v1729
    %v1735 = vadd.f32 %v1687, %v1732
    %1736 = vmatpush.msra.mxu0 0.0
    %1737 = vmatpush.msra.mxu0 0.0
    %1738 = vmatpush.msra.mxu0 0.0
    %1739 = vmatpush.msra.mxu0 0.0
    %1740 = vmatpush.msra.mxu0 0.0
    %1741 = vmatpush.msra.mxu0 0.0
    %1742 = vmatpush.msra.mxu0 0.0
    %1743 = vmatpush.msra.mxu0 0.0
    %1744 = vmatpush.msra.mxu0 0.0
    %1745 = vmatpush.msra.mxu0 0.0
    %1746 = vmatpush.msra.mxu0 0.0
    %1747 = vmatpush.msra.mxu0 0.0
    %1748 = vmatpush.msra.mxu0 %v53
    %1749 = vmatpush.msra.mxu0 %v52
    %1750 = vmatpush.msra.mxu0 %v51
    %1751 = vmatpush.msra.mxu0 %v50
    %1752 = vmatmul.f32.gmra.mxu0 %v1659
    %v1753 = vpop.f32.mrf.mxu0
    %v1754 = vadd.f32 0.0, %v1753
    %1755 = vmatmul.f32.gmra.mxu0 %v1661
    %v1756 = vpop.f32.mrf.mxu0
    %v1757 = vadd.f32 0.0, %v1756
    %1758 = vdwg.mxu0
    %1759 = vmatpush.msra.mxu0 0.0
    %1760 = vmatpush.msra.mxu0 0.0
    %1761 = vmatpush.msra.mxu0 0.0
    %1762 = vmatpush.msra.mxu0 0.0
    %1763 = vmatpush.msra.mxu0 0.0
    %1764 = vmatpush.msra.mxu0 0.0
    %1765 = vmatpush.msra.mxu0 0.0
    %1766 = vmatpush.msra.mxu0 0.0
    %1767 = vmatpush.msra.mxu0 0.0
    %1768 = vmatpush.msra.mxu0 0.0
    %1769 = vmatpush.msra.mxu0 0.0
    %1770 = vmatpush.msra.mxu0 0.0
    %1771 = vmatpush.msra.mxu0 0.0
    %1772 = vmatpush.msra.mxu0 0.0
    %1773 = vmatpush.msra.mxu0 %v1757
    %1774 = vmatpush.msra.mxu0 %v1754
    %1775 = vmatmul.f32.gmra.mxu0 %v215
    %v1776 = vpop.f32.mrf.mxu0
    %v1777 = vadd.f32 0.0, %v1776
    %1778 = vmatmul.f32.gmra.mxu0 %v217
    %v1779 = vpop.f32.mrf.mxu0
    %v1780 = vadd.f32 0.0, %v1779
    %1781 = vdwg.mxu0
    %v1782 = vadd.f32 %v1734, %v1777
    %v1783 = vadd.f32 %v1735, %v1780
    %1784 = vmatpush.msra.mxu0 0.0
    %1785 = vmatpush.msra.mxu0 0.0
    %1786 = vmatpush.msra.mxu0 0.0
    %1787 = vmatpush.msra.mxu0 0.0
    %1788 = vmatpush.msra.mxu0 0.0
    %1789 = vmatpush.msra.mxu0 0.0
    %1790 = vmatpush.msra.mxu0 0.0
    %1791 = vmatpush.msra.mxu0 0.0
    %1792 = vmatpush.msra.mxu0 0.0
    %1793 = vmatpush.msra.mxu0 0.0
    %1794 = vmatpush.msra.mxu0 0.0
    %1795 = vmatpush.msra.mxu0 0.0
    %1796 = vmatpush.msra.mxu0 %v57
    %1797 = vmatpush.msra.mxu0 %v56
    %1798 = vmatpush.msra.mxu0 %v55
    %1799 = vmatpush.msra.mxu0 %v54
    %1800 = vmatmul.f32.gmra.mxu0 %v1659
    %v1801 = vpop.f32.mrf.mxu0
    %v1802 = vadd.f32 0.0, %v1801
    %1803 = vmatmul.f32.gmra.mxu0 %v1661
    %v1804 = vpop.f32.mrf.mxu0
    %v1805 = vadd.f32 0.0, %v1804
    %1806 = vdwg.mxu0
    %1807 = vmatpush.msra.mxu0 0.0
    %1808 = vmatpush.msra.mxu0 0.0
    %1809 = vmatpush.msra.mxu0 0.0
    %1810 = vmatpush.msra.mxu0 0.0
    %1811 = vmatpush.msra.mxu0 0.0
    %1812 = vmatpush.msra.mxu0 0.0
    %1813 = vmatpush.msra.mxu0 0.0
    %1814 = vmatpush.msra.mxu0 0.0
    %1815 = vmatpush.msra.mxu0 0.0
    %1816 = vmatpush.msra.mxu0 0.0
    %1817 = vmatpush.msra.mxu0 0.0
    %1818 = vmatpush.msra.mxu0 0.0
    %1819 = vmatpush.msra.mxu0 0.0
    %1820 = vmatpush.msra.mxu0 0.0
    %1821 = vmatpush.msra.mxu0 %v1805
    %1822 = vmatpush.msra.mxu0 %v1802
    %1823 = vmatmul.f32.gmra.mxu0 %v271
    %v1824 = vpop.f32.mrf.mxu0
    %v1825 = vadd.f32 0.0, %v1824
    %1826 = vmatmul.f32.gmra.mxu0 %v273
    %v1827 = vpop.f32.mrf.mxu0
    %v1828 = vadd.f32 0.0, %v1827
    %1829 = vdwg.mxu0
    %v1830 = vadd.f32 %v1782, %v1825
    %v1831 = vadd.f32 %v1783, %v1828
    %v1832 = vxor.u32 %v1830, 2147483648
    %v1833 = vxor.u32 %v1831, 2147483648
    %v1834 = vmul.f32 %v1832, 1.442695
    %v1835 = vpow.pop %v1834
    %v1836 = vmul.f32 %v1833, 1.442695
    %v1837 = vpow.pop %v1836
    %v1838 = vadd.f32 %v1835, 1.0
    %v1839 = vadd.f32 %v1837, 1.0
    %v1840 = vrcp.pop %v1838
    %v1841 = vmul.f32 %v1838, %v1840
    %v1842 = vsub.f32 1.0, %v1841
    %v1843 = vmul.f32 %v1840, %v1842
    %v1844 = vadd.f32 %v1840, %v1843
    %vm1845 = vweird.f32 %v1838
    %vm1846 = vweird.f32 %v1840
    %vm1847 = vmor %vm1845, %vm1846
    %v1848 = vsel %vm1847, %v1840, %v1844
    %v1849 = vand.u32 2147483647, %v1838
    %vm1850 = vcmp.eq.f32.partialorder %v1849, 8.507059e+37
    %v1851 = vand.u32 %v1838, 2147483648
    %v1852 = vor.u32 1.1754944e-38, %v1851
    %v1853 = vsel %vm1850, %v1852, %v1848
    %v1854 = vmul.f32 1.0, %v1853
    %v1855 = vrcp.pop %v1839
    %v1856 = vmul.f32 %v1839, %v1855
    %v1857 = vsub.f32 1.0, %v1856
    %v1858 = vmul.f32 %v1855, %v1857
    %v1859 = vadd.f32 %v1855, %v1858
    %vm1860 = vweird.f32 %v1839
    %vm1861 = vweird.f32 %v1855
    %vm1862 = vmor %vm1860, %vm1861
    %v1863 = vsel %vm1862, %v1855, %v1859
    %v1864 = vand.u32 2147483647, %v1839
    %vm1865 = vcmp.eq.f32.partialorder %v1864, 8.507059e+37
    %v1866 = vand.u32 %v1839, 2147483648
    %v1867 = vor.u32 1.1754944e-38, %v1866
    %v1868 = vsel %vm1865, %v1867, %v1863
    %v1869 = vmul.f32 1.0, %v1868
    %1872 = vrot.lane.b32.xlu0 %v1830, 32
    %v1873 = vpop.permute.xlu0 %1872
    %1874 = vrot.lane.b32.xlu0 %v1831, 32
    %v1875 = vpop.permute.xlu0 %1874
    %v1878 = vmul.f32 %v1854, %v1873
    %v1879 = vmul.f32 %v1869, %v1875
    %1882 = vrot.lane.b32.xlu0 %v1878, 64
    %v1883 = vpop.permute.xlu0 %1882
    %1884 = vrot.lane.b32.xlu0 %v1879, 64
    %v1885 = vpop.permute.xlu0 %1884
    %v1888 = vadd.f32 %v1830, %v1883
    %v1889 = vadd.f32 %v1831, %v1885
    %v1890 = vtanh.pop %v1888
    %v1891 = vtanh.pop %v1889
    %v1892 = vsub.f32 1.0, %v1854
    %v1893 = vsub.f32 1.0, %v1869
    %1896 = vrot.lane.b32.xlu0 %v1890, 96
    %v1897 = vpop.permute.xlu0 %1896
    %1898 = vrot.lane.b32.xlu0 %v1891, 96
    %v1899 = vpop.permute.xlu0 %1898
    %v1902 = vmul.f32 %v1892, %v1897
    %v1903 = vmul.f32 %v1893, %v1899
    %v1904 = vmul.f32 %v1854, %v1651
    %v1905 = vmul.f32 %v1869, %v1652
    %v1906 = vadd.f32 %v1902, %v1904
    %v1907 = vadd.f32 %v1903, %v1905
    %1910 = vrot.lane.b32.xlu0 %v1906, 96
    %v1911 = vpop.permute.xlu0 %1910
    %1912 = vrot.lane.b32.xlu0 %v1907, 96
    %v1913 = vpop.permute.xlu0 %1912
    %v1914 = vsel %vm105, %v1911, 0
    %v1916 = vsel %vm105, %v1913, 0
    %1918 = vmatpush.msra.mxu0 0.0
    %1919 = vmatpush.msra.mxu0 0.0
    %1920 = vmatpush.msra.mxu0 0.0
    %1921 = vmatpush.msra.mxu0 0.0
    %1922 = vmatpush.msra.mxu0 0.0
    %1923 = vmatpush.msra.mxu0 0.0
    %1924 = vmatpush.msra.mxu0 0.0
    %1925 = vmatpush.msra.mxu0 0.0
    %1926 = vmatpush.msra.mxu0 0.0
    %1927 = vmatpush.msra.mxu0 0.0
    %1928 = vmatpush.msra.mxu0 0.0
    %1929 = vmatpush.msra.mxu0 0.0
    %1930 = vmatpush.msra.mxu0 %v61
    %1931 = vmatpush.msra.mxu0 %v60
    %1932 = vmatpush.msra.mxu0 %v59
    %1933 = vmatpush.msra.mxu0 %v58
    %1934 = vmatmul.f32.gmra.mxu0 %v1914
    %v1935 = vpop.f32.mrf.mxu0
    %v1936 = vadd.f32 0.0, %v1935
    %1937 = vmatmul.f32.gmra.mxu0 %v1916
    %v1938 = vpop.f32.mrf.mxu0
    %v1939 = vadd.f32 0.0, %v1938
    %1940 = vdwg.mxu0
    %v1941 = vadd.f32 %v96, %v1936
    %v1942 = vadd.f32 %v99, %v1939
    %1943 = vmatpush.msra.mxu0 0.0
    %1944 = vmatpush.msra.mxu0 0.0
    %1945 = vmatpush.msra.mxu0 0.0
    %1946 = vmatpush.msra.mxu0 0.0
    %1947 = vmatpush.msra.mxu0 0.0
    %1948 = vmatpush.msra.mxu0 0.0
    %1949 = vmatpush.msra.mxu0 0.0
    %1950 = vmatpush.msra.mxu0 0.0
    %1951 = vmatpush.msra.mxu0 0.0
    %1952 = vmatpush.msra.mxu0 0.0
    %1953 = vmatpush.msra.mxu0 0.0
    %1954 = vmatpush.msra.mxu0 0.0
    %1955 = vmatpush.msra.mxu0 %v49
    %1956 = vmatpush.msra.mxu0 %v48
    %1957 = vmatpush.msra.mxu0 %v47
    %1958 = vmatpush.msra.mxu0 %v46
    %1959 = vmatmul.f32.gmra.mxu0 %v1914
    %v1960 = vpop.f32.mrf.mxu0
    %v1961 = vadd.f32 0.0, %v1960
    %1962 = vmatmul.f32.gmra.mxu0 %v1916
    %v1963 = vpop.f32.mrf.mxu0
    %v1964 = vadd.f32 0.0, %v1963
    %1965 = vdwg.mxu0
    %1966 = vmatpush.msra.mxu0 0.0
    %1967 = vmatpush.msra.mxu0 0.0
    %1968 = vmatpush.msra.mxu0 0.0
    %1969 = vmatpush.msra.mxu0 0.0
    %1970 = vmatpush.msra.mxu0 0.0
    %1971 = vmatpush.msra.mxu0 0.0
    %1972 = vmatpush.msra.mxu0 0.0
    %1973 = vmatpush.msra.mxu0 0.0
    %1974 = vmatpush.msra.mxu0 0.0
    %1975 = vmatpush.msra.mxu0 0.0
    %1976 = vmatpush.msra.mxu0 0.0
    %1977 = vmatpush.msra.mxu0 0.0
    %1978 = vmatpush.msra.mxu0 0.0
    %1979 = vmatpush.msra.mxu0 0.0
    %1980 = vmatpush.msra.mxu0 %v1964
    %1981 = vmatpush.msra.mxu0 %v1961
    %1982 = vmatmul.f32.gmra.mxu0 %v159
    %v1983 = vpop.f32.mrf.mxu0
    %v1984 = vadd.f32 0.0, %v1983
    %1985 = vmatmul.f32.gmra.mxu0 %v161
    %v1986 = vpop.f32.mrf.mxu0
    %v1987 = vadd.f32 0.0, %v1986
    %1988 = vdwg.mxu0
    %v1989 = vadd.f32 %v1941, %v1984
    %v1990 = vadd.f32 %v1942, %v1987
    %1991 = vmatpush.msra.mxu0 0.0
    %1992 = vmatpush.msra.mxu0 0.0
    %1993 = vmatpush.msra.mxu0 0.0
    %1994 = vmatpush.msra.mxu0 0.0
    %1995 = vmatpush.msra.mxu0 0.0
    %1996 = vmatpush.msra.mxu0 0.0
    %1997 = vmatpush.msra.mxu0 0.0
    %1998 = vmatpush.msra.mxu0 0.0
    %1999 = vmatpush.msra.mxu0 0.0
    %2000 = vmatpush.msra.mxu0 0.0
    %2001 = vmatpush.msra.mxu0 0.0
    %2002 = vmatpush.msra.mxu0 0.0
    %2003 = vmatpush.msra.mxu0 %v53
    %2004 = vmatpush.msra.mxu0 %v52
    %2005 = vmatpush.msra.mxu0 %v51
    %2006 = vmatpush.msra.mxu0 %v50
    %2007 = vmatmul.f32.gmra.mxu0 %v1914
    %v2008 = vpop.f32.mrf.mxu0
    %v2009 = vadd.f32 0.0, %v2008
    %2010 = vmatmul.f32.gmra.mxu0 %v1916
    %v2011 = vpop.f32.mrf.mxu0
    %v2012 = vadd.f32 0.0, %v2011
    %2013 = vdwg.mxu0
    %2014 = vmatpush.msra.mxu0 0.0
    %2015 = vmatpush.msra.mxu0 0.0
    %2016 = vmatpush.msra.mxu0 0.0
    %2017 = vmatpush.msra.mxu0 0.0
    %2018 = vmatpush.msra.mxu0 0.0
    %2019 = vmatpush.msra.mxu0 0.0
    %2020 = vmatpush.msra.mxu0 0.0
    %2021 = vmatpush.msra.mxu0 0.0
    %2022 = vmatpush.msra.mxu0 0.0
    %2023 = vmatpush.msra.mxu0 0.0
    %2024 = vmatpush.msra.mxu0 0.0
    %2025 = vmatpush.msra.mxu0 0.0
    %2026 = vmatpush.msra.mxu0 0.0
    %2027 = vmatpush.msra.mxu0 0.0
    %2028 = vmatpush.msra.mxu0 %v2012
    %2029 = vmatpush.msra.mxu0 %v2009
    %2030 = vmatmul.f32.gmra.mxu0 %v215
    %v2031 = vpop.f32.mrf.mxu0
    %v2032 = vadd.f32 0.0, %v2031
    %2033 = vmatmul.f32.gmra.mxu0 %v217
    %v2034 = vpop.f32.mrf.mxu0
    %v2035 = vadd.f32 0.0, %v2034
    %2036 = vdwg.mxu0
    %v2037 = vadd.f32 %v1989, %v2032
    %v2038 = vadd.f32 %v1990, %v2035
    %2039 = vmatpush.msra.mxu0 0.0
    %2040 = vmatpush.msra.mxu0 0.0
    %2041 = vmatpush.msra.mxu0 0.0
    %2042 = vmatpush.msra.mxu0 0.0
    %2043 = vmatpush.msra.mxu0 0.0
    %2044 = vmatpush.msra.mxu0 0.0
    %2045 = vmatpush.msra.mxu0 0.0
    %2046 = vmatpush.msra.mxu0 0.0
    %2047 = vmatpush.msra.mxu0 0.0
    %2048 = vmatpush.msra.mxu0 0.0
    %2049 = vmatpush.msra.mxu0 0.0
    %2050 = vmatpush.msra.mxu0 0.0
    %2051 = vmatpush.msra.mxu0 %v57
    %2052 = vmatpush.msra.mxu0 %v56
    %2053 = vmatpush.msra.mxu0 %v55
    %2054 = vmatpush.msra.mxu0 %v54
    %2055 = vmatmul.f32.gmra.mxu0 %v1914
    %v2056 = vpop.f32.mrf.mxu0
    %v2057 = vadd.f32 0.0, %v2056
    %2058 = vmatmul.f32.gmra.mxu0 %v1916
    %v2059 = vpop.f32.mrf.mxu0
    %v2060 = vadd.f32 0.0, %v2059
    %2061 = vdwg.mxu0
    %2062 = vmatpush.msra.mxu0 0.0
    %2063 = vmatpush.msra.mxu0 0.0
    %2064 = vmatpush.msra.mxu0 0.0
    %2065 = vmatpush.msra.mxu0 0.0
    %2066 = vmatpush.msra.mxu0 0.0
    %2067 = vmatpush.msra.mxu0 0.0
    %2068 = vmatpush.msra.mxu0 0.0
    %2069 = vmatpush.msra.mxu0 0.0
    %2070 = vmatpush.msra.mxu0 0.0
    %2071 = vmatpush.msra.mxu0 0.0
    %2072 = vmatpush.msra.mxu0 0.0
    %2073 = vmatpush.msra.mxu0 0.0
    %2074 = vmatpush.msra.mxu0 0.0
    %2075 = vmatpush.msra.mxu0 0.0
    %2076 = vmatpush.msra.mxu0 %v2060
    %2077 = vmatpush.msra.mxu0 %v2057
    %2078 = vmatmul.f32.gmra.mxu0 %v271
    %v2079 = vpop.f32.mrf.mxu0
    %v2080 = vadd.f32 0.0, %v2079
    %2081 = vmatmul.f32.gmra.mxu0 %v273
    %v2082 = vpop.f32.mrf.mxu0
    %v2083 = vadd.f32 0.0, %v2082
    %2084 = vdwg.mxu0
    %v2085 = vadd.f32 %v2037, %v2080
    %v2086 = vadd.f32 %v2038, %v2083
    %v2087 = vxor.u32 %v2085, 2147483648
    %v2088 = vxor.u32 %v2086, 2147483648
    %v2089 = vmul.f32 %v2087, 1.442695
    %v2090 = vpow.pop %v2089
    %v2091 = vmul.f32 %v2088, 1.442695
    %v2092 = vpow.pop %v2091
    %v2093 = vadd.f32 %v2090, 1.0
    %v2094 = vadd.f32 %v2092, 1.0
    %v2095 = vrcp.pop %v2093
    %v2096 = vmul.f32 %v2093, %v2095
    %v2097 = vsub.f32 1.0, %v2096
    %v2098 = vmul.f32 %v2095, %v2097
    %v2099 = vadd.f32 %v2095, %v2098
    %vm2100 = vweird.f32 %v2093
    %vm2101 = vweird.f32 %v2095
    %vm2102 = vmor %vm2100, %vm2101
    %v2103 = vsel %vm2102, %v2095, %v2099
    %v2104 = vand.u32 2147483647, %v2093
    %vm2105 = vcmp.eq.f32.partialorder %v2104, 8.507059e+37
    %v2106 = vand.u32 %v2093, 2147483648
    %v2107 = vor.u32 1.1754944e-38, %v2106
    %v2108 = vsel %vm2105, %v2107, %v2103
    %v2109 = vmul.f32 1.0, %v2108
    %v2110 = vrcp.pop %v2094
    %v2111 = vmul.f32 %v2094, %v2110
    %v2112 = vsub.f32 1.0, %v2111
    %v2113 = vmul.f32 %v2110, %v2112
    %v2114 = vadd.f32 %v2110, %v2113
    %vm2115 = vweird.f32 %v2094
    %vm2116 = vweird.f32 %v2110
    %vm2117 = vmor %vm2115, %vm2116
    %v2118 = vsel %vm2117, %v2110, %v2114
    %v2119 = vand.u32 2147483647, %v2094
    %vm2120 = vcmp.eq.f32.partialorder %v2119, 8.507059e+37
    %v2121 = vand.u32 %v2094, 2147483648
    %v2122 = vor.u32 1.1754944e-38, %v2121
    %v2123 = vsel %vm2120, %v2122, %v2118
    %v2124 = vmul.f32 1.0, %v2123
    %2127 = vrot.lane.b32.xlu0 %v2085, 32
    %v2128 = vpop.permute.xlu0 %2127
    %2129 = vrot.lane.b32.xlu0 %v2086, 32
    %v2130 = vpop.permute.xlu0 %2129
    %v2133 = vmul.f32 %v2109, %v2128
    %v2134 = vmul.f32 %v2124, %v2130
    %2137 = vrot.lane.b32.xlu0 %v2133, 64
    %v2138 = vpop.permute.xlu0 %2137
    %2139 = vrot.lane.b32.xlu0 %v2134, 64
    %v2140 = vpop.permute.xlu0 %2139
    %v2143 = vadd.f32 %v2085, %v2138
    %v2144 = vadd.f32 %v2086, %v2140
    %v2145 = vtanh.pop %v2143
    %v2146 = vtanh.pop %v2144
    %v2147 = vsub.f32 1.0, %v2109
    %v2148 = vsub.f32 1.0, %v2124
    %2151 = vrot.lane.b32.xlu0 %v2145, 96
    %v2152 = vpop.permute.xlu0 %2151
    %2153 = vrot.lane.b32.xlu0 %v2146, 96
    %v2154 = vpop.permute.xlu0 %2153
    %v2157 = vmul.f32 %v2147, %v2152
    %v2158 = vmul.f32 %v2148, %v2154
    %v2159 = vmul.f32 %v2109, %v1906
    %v2160 = vmul.f32 %v2124, %v1907
    %v2161 = vadd.f32 %v2157, %v2159
    %v2162 = vadd.f32 %v2158, %v2160
    %2164 = vrot.lane.b32.xlu0 %v45, 48
    %v2165 = vpop.permute.xlu0 %2164
    %2168 = vrot.lane.b32.xlu0 %v2161, 96
    %v2169 = vpop.permute.xlu0 %2168
    %2170 = vrot.lane.b32.xlu0 %v2162, 96
    %v2171 = vpop.permute.xlu0 %2170
    %v2174 = vsel %vm158, %v2165, 0
    %2176 = vmatpush.msra.mxu0 0.0
    %2177 = vmatpush.msra.mxu0 0.0
    %2178 = vmatpush.msra.mxu0 0.0
    %2179 = vmatpush.msra.mxu0 0.0
    %2180 = vmatpush.msra.mxu0 0.0
    %2181 = vmatpush.msra.mxu0 0.0
    %2182 = vmatpush.msra.mxu0 0.0
    %2183 = vmatpush.msra.mxu0 0.0
    %2184 = vmatpush.msra.mxu0 0.0
    %2185 = vmatpush.msra.mxu0 0.0
    %2186 = vmatpush.msra.mxu0 0.0
    %2187 = vmatpush.msra.mxu0 0.0
    %2188 = vmatpush.msra.mxu0 0.0
    %2189 = vmatpush.msra.mxu0 0.0
    %2190 = vmatpush.msra.mxu0 %v2171
    %2191 = vmatpush.msra.mxu0 %v2169
    %2192 = vmatmul.f32.gmra.mxu0 %v2174
    %v2193 = vpop.f32.mrf.mxu0
    %v2194 = vadd.f32 0.0, %v2193
    %2195 = vdwg.mxu0
    %v2196 = vperm.slane %v69, 0
    %v2197 = vmul.f32 %v2194, %v2196
    %vm2198 = vcmask 254976
    %v2199 = vsel %vm2198, %v2197, 0.0
    %2200 = vadd.xlane.f32.xlu0 %v2199
    %v2201 = vpop.xlane.xlu0 %2200
    %v2202 = vadd.f32 %v2201, %v2196
    %v2203 = vxor.u32 %v2202, 2147483648
    %v2204 = vmul.f32 %v2203, 1.442695
    %v2205 = vpow.pop %v2204
    %v2206 = vadd.f32 %v2205, 1.0
    %v2207 = vrcp.pop %v2206
    %v2208 = vmul.f32 %v2206, %v2207
    %v2209 = vsub.f32 1.0, %v2208
    %v2210 = vmul.f32 %v2207, %v2209
    %v2211 = vadd.f32 %v2207, %v2210
    %vm2212 = vweird.f32 %v2206
    %vm2213 = vweird.f32 %v2207
    %vm2214 = vmor %vm2212, %vm2213
    %v2215 = vsel %vm2214, %v2207, %v2211
    %v2216 = vand.u32 2147483647, %v2206
    %vm2217 = vcmp.eq.f32.partialorder %v2216, 8.507059e+37
    %v2218 = vand.u32 %v2206, 2147483648
    %v2219 = vor.u32 1.1754944e-38, %v2218
    %v2220 = vsel %vm2217, %v2219, %v2215
    %v2221 = vmul.f32 1.0, %v2220
    %2223 = vrot.lane.b32.xlu0 %v2221, 96
    %v2224 = vpop.permute.xlu0 %2223
    %vm2226 = vcmask 1024
    %2227 = vst.msk [vmem:[%s2] sm:$0x3] %vm2226, %v2224
    // Predicated region
    $region18: #{tpu_custom_call.1} parent=1 // pred_check
      _
    $region19: #{tpu_custom_call.1} parent=1 // pred_check_branch
      %2229 = sbr.rel (0) target = $region21
    $region20: #{tpu_custom_call.1} parent=1 // pred_region
      _
    $region21: #{tpu_custom_call.1} parent=1 // pred_fallthru
      _
    // Predicated region
    $region22: #{tpu_custom_call.1} parent=1 // pred_check
      _
    $region23: #{tpu_custom_call.1} parent=1 // pred_check_branch
      %2231 = sbr.rel (0) target = $region25
    $region24: #{tpu_custom_call.1} parent=1 // pred_region
      _
    $region25: #{tpu_custom_call.1} parent=1 // pred_fallthru
      _
    %2232 = vsyncpa [#allocation3], 1
    %2233 = vsyncpa [#allocation5], 1

</llo_original>
